<compile_context>
chip_gen: v5e
topology: v5e:2x2
jax: 0.10.0
libtpu: 0.0.40
codegen_flags: <defaults>
</compile_context>

<pallas_src>
import math
import functools

import jax
import jax.numpy as jnp
from jax.experimental import pallas as pl
from jax.experimental.pallas import tpu as pltpu


# ------------------------------ fused kernel --------------------------------

def _head_kernel(x_ref, *refs, num_layers):
    """Fused (BN-folded) Linear/ReLU chain over one row tile.

    refs = (w0, b0, w1, b1, ..., w_{L-1}, b_{L-1}, o_ref)
      w_l : (K_l, N_l) bf16   (torch weight.T, BN folded into w0/b0)
      b_l : (1,  N_l) f32
    """
    o_ref = refs[-1]
    h = x_ref[...]                                          # (tm, in_f) bf16
    for l in range(num_layers):
        w = refs[2 * l][...]                                # bf16, VMEM-resident
        b = refs[2 * l + 1][...]                            # f32  (1, N)
        # bf16 MXU inputs, f32 accumulation; bias add in f32.
        y = jnp.dot(h, w, preferred_element_type=jnp.float32) + b
        if l < num_layers - 1:
            # Fused epilogue: f32 ReLU -> bf16, fed straight into next matmul.
            h = jnp.maximum(y, 0.0).astype(jnp.bfloat16)
        else:
            h = y                                           # final layer: f32
    o_ref[...] = h.astype(o_ref.dtype)


# ------------------------------- tile picking --------------------------------

def _pick_row_tile(M, block_rows):
    """Row tile: multiple of 8 (sublane) or the full row extent; never leave a
    v7x TensorCore idle when the batch could be split into two tiles."""
    tm = min(block_rows, M)
    if tm < M:
        tm = max(8, (tm // 8) * 8)
    if tm == M and M >= 16:
        # Whole batch fits in one tile -> split into two grid steps so both
        # TensorCores on v7x get work.
        half = -(-M // 2)
        tm_split = max(8, (-(-half // 8)) * 8)
        if tm_split < M:
            tm = tm_split
    return tm


def _vmem_limit_bytes(tm, in_f, layers, n_out):
    """Actual footprint (x/out double-buffered, constant weights single-
    buffered, per-layer activation scratch) with 2x headroom, clamped to a
    range that is valid on every generation (v5e 16 MiB scoped default,
    v7x 64 MiB physical)."""
    fp = 2 * tm * in_f * 2                       # x tile, bf16, 2 buffers
    fp += 2 * tm * n_out * 4                     # out tile, f32, 2 buffers
    for (w, b) in layers:
        fp += w.size * 2 + b.size * 4            # single-buffered constants
    max_n = max(w.shape[1] for (w, _) in layers)
    fp += tm * max_n * 6                         # f32 y + bf16 h live per layer
    limit = 2 * fp + (4 << 20)
    return int(max(16 << 20, min(limit, 48 << 20)))


# -------------------------------- wrapper ------------------------------------

def head_forward(x, layers, *, block_rows=512):
    """x: (M, in_features) f32 or bf16.  layers: list of (w_bf16 (K,N), b_f32 (1,N))."""
    M, K = x.shape
    num_layers = len(layers)
    n_out = layers[-1][0].shape[1]

    # Stream x as bf16: the matmuls consume bf16 anyway, so this is numerically
    # identical and halves the largest streamed input's HBM traffic.
    if x.dtype != jnp.bfloat16:
        x = x.astype(jnp.bfloat16)

    tm = _pick_row_tile(M, block_rows)
    grid = (pl.cdiv(M, tm),)                     # ragged last block is masked

    in_specs = [pl.BlockSpec((tm, K), lambda i: (i, 0))]
    flat_args = [x]
    for (w, b) in layers:
        kin, nout = w.shape
        # Full-array constant blocks, fetched once and kept VMEM-resident;
        # single-buffered (no point double-buffering a block that never changes).
        in_specs.append(pl.BlockSpec((kin, nout), lambda i: (0, 0),
                                     pipeline_mode=pl.Buffered(1)))
        in_specs.append(pl.BlockSpec((1, nout), lambda i: (0, 0),
                                     pipeline_mode=pl.Buffered(1)))
        flat_args.append(w)
        flat_args.append(b)

    out = pl.pallas_call(
        functools.partial(_head_kernel, num_layers=num_layers),
        out_shape=jax.ShapeDtypeStruct((M, n_out), jnp.float32),
        grid=grid,
        in_specs=in_specs,
        out_specs=pl.BlockSpec((tm, n_out), lambda i: (i, 0)),
        compiler_params=pltpu.CompilerParams(
            dimension_semantics=("parallel",),
            vmem_limit_bytes=_vmem_limit_bytes(tm, K, layers, n_out)),
    )(*flat_args)
    return out


# --------------------------- parameter creation ------------------------------

def init_head_params(key, in_features, enc_features, mlp_ratio, depth):
    """torch-default Linear init; BN (eval mode) folded into the first Linear."""
    hidden = enc_features * mlp_ratio
    dims = [in_features] + [hidden] * (depth + 1) + [enc_features]

    layers_f32 = []
    keys = jax.random.split(key, len(dims) - 1)
    for k, (a, b_) in zip(keys, zip(dims[:-1], dims[1:])):
        k1, k2 = jax.random.split(k)
        bound = 1.0 / math.sqrt(a)
        w = jax.random.uniform(k1, (a, b_), jnp.float32, -bound, bound)  # = torch W.T
        b = jax.random.uniform(k2, (b_,), jnp.float32, -bound, bound)
        layers_f32.append((w, b))

    # BatchNorm1d(in_features) in eval mode with fresh running stats:
    #   y = (x - mean)/sqrt(var + eps) * gamma + beta,  mean=0, var=1, gamma=1, beta=0
    # Fold the affine BN into the first Linear (exact, done in f32):
    #   BN(x) @ W + b = x @ (s[:,None]*W) + (t @ W + b),  s = gamma/sqrt(var+eps), t = beta - mean*s
    bn_eps = 1e-5
    running_mean = jnp.zeros((in_features,), jnp.float32)
    running_var = jnp.ones((in_features,), jnp.float32)
    gamma = jnp.ones((in_features,), jnp.float32)
    beta = jnp.zeros((in_features,), jnp.float32)
    s = gamma * jax.lax.rsqrt(running_var + bn_eps)
    t = beta - running_mean * s

    w0, b0 = layers_f32[0]
    b0_f = b0 + t @ w0
    w0_f = w0 * s[:, None]
    folded = [(w0_f, b0_f)] + layers_f32[1:]

    # bf16 weights (halves weight HBM traffic, native MXU dtype); f32 biases.
    layers = [(w.astype(jnp.bfloat16), b.reshape(1, -1).astype(jnp.float32))
              for (w, b) in folded]
    return layers


# --------------------------- reference (same math) ---------------------------

def head_reference(x, layers):
    h = x.astype(jnp.bfloat16)
    L = len(layers)
    for l, (w, b) in enumerate(layers):
        y = jnp.dot(h, w, preferred_element_type=jnp.float32) + b
        h = jnp.maximum(y, 0.0).astype(jnp.bfloat16) if l < L - 1 else y
    return h


# ---------------------------------- main -------------------------------------

if __name__ == "__main__":
    # Small, lane-dense configuration:
    #   hidden = enc_features * mlp_ratio = 256, output = 128 (multiples of 128).
    in_features = 64
    enc_features = 128
    mlp_ratio = 2
    depth = 2
    batch = 256

    key = jax.random.PRNGKey(0)
    pkey, xkey = jax.random.split(key)
    layers = init_head_params(pkey, in_features, enc_features, mlp_ratio, depth)
    x = jax.random.normal(xkey, (batch, in_features), dtype=jnp.float32)

    out = head_forward(x, layers)          # batch=256 -> 2 grid steps (2 TCs on v7x)
    out = jax.block_until_ready(out)

    assert out.shape == (batch, enc_features), out.shape
    assert out.dtype == jnp.float32, out.dtype
    assert bool(jnp.all(jnp.isfinite(out)))

    # Sanity check against a pure-JAX reference using the same bf16-MXU math.
    ref = jax.block_until_ready(head_reference(x, layers))
    max_err = float(jnp.max(jnp.abs(out - ref)))
    assert max_err < 2e-2, f"max abs error {max_err}"

    print("KERNEL_OK")
</pallas_src>

<mosaic_0001>
module attributes {stable_mosaic.version = 11 : i64} {
  func.func @_head_kernel(%arg0: i32, %arg1: memref<128x64xbf16, #tpu.memory_space<vmem>>, %arg2: memref<64x256xbf16, #tpu.memory_space<vmem>>, %arg3: memref<1x256xf32, #tpu.memory_space<vmem>>, %arg4: memref<256x256xbf16, #tpu.memory_space<vmem>>, %arg5: memref<1x256xf32, #tpu.memory_space<vmem>>, %arg6: memref<256x256xbf16, #tpu.memory_space<vmem>>, %arg7: memref<1x256xf32, #tpu.memory_space<vmem>>, %arg8: memref<256x128xbf16, #tpu.memory_space<vmem>>, %arg9: memref<1x128xf32, #tpu.memory_space<vmem>>, %arg10: memref<128x128xf32, #tpu.memory_space<vmem>>) attributes {dimension_semantics = [#tpu.dimension_semantics<parallel>], iteration_bounds = array<i64: 2>, scalar_prefetch = 0 : i64, scratch_operands = 0 : i64, tpu.core_type = #tpu.core_type<tc>, window_params = [{transform_indices = @transform_0, window_bounds = array<i64: 128, 64>}, {pipeline_mode = #tpu.pipeline_mode<synchronous>, transform_indices = @transform_1, window_bounds = array<i64: 64, 256>}, {pipeline_mode = #tpu.pipeline_mode<synchronous>, transform_indices = @transform_2, window_bounds = array<i64: 1, 256>}, {pipeline_mode = #tpu.pipeline_mode<synchronous>, transform_indices = @transform_3, window_bounds = array<i64: 256, 256>}, {pipeline_mode = #tpu.pipeline_mode<synchronous>, transform_indices = @transform_4, window_bounds = array<i64: 1, 256>}, {pipeline_mode = #tpu.pipeline_mode<synchronous>, transform_indices = @transform_5, window_bounds = array<i64: 256, 256>}, {pipeline_mode = #tpu.pipeline_mode<synchronous>, transform_indices = @transform_6, window_bounds = array<i64: 1, 256>}, {pipeline_mode = #tpu.pipeline_mode<synchronous>, transform_indices = @transform_7, window_bounds = array<i64: 256, 128>}, {pipeline_mode = #tpu.pipeline_mode<synchronous>, transform_indices = @transform_8, window_bounds = array<i64: 1, 128>}, {transform_indices = @transform_9, window_bounds = array<i64: 128, 128>}]} {
    %c0 = arith.constant 0 : index
    %c0_0 = arith.constant 0 : index
    %0 = vector.load %arg1[%c0, %c0_0] : memref<128x64xbf16, #tpu.memory_space<vmem>>, vector<128x64xbf16>
    %c0_1 = arith.constant 0 : index
    %c0_2 = arith.constant 0 : index
    %1 = vector.load %arg2[%c0_1, %c0_2] : memref<64x256xbf16, #tpu.memory_space<vmem>>, vector<64x256xbf16>
    %c0_3 = arith.constant 0 : index
    %c0_4 = arith.constant 0 : index
    %2 = vector.load %arg3[%c0_3, %c0_4] : memref<1x256xf32, #tpu.memory_space<vmem>>, vector<1x256xf32>
    %cst = arith.constant dense<0.000000e+00> : vector<128x256xf32>
    %3 = tpu.matmul %0, %1, %cst {dimension_numbers = #tpu.dot_dimension_numbers<[1], [0], [0], [1], [0, 0, 1, 1], [], []>} : vector<128x64xbf16>, vector<64x256xbf16>, vector<128x256xf32> -> vector<128x256xf32>
    %4 = vector.broadcast %2 : vector<1x256xf32> to vector<128x256xf32>
    %5 = arith.addf %3, %4 : vector<128x256xf32>
    %cst_5 = arith.constant 0.000000e+00 : f32
    %6 = vector.broadcast %cst_5 : f32 to vector<128x256xf32>
    %7 = arith.maximumf %5, %6 : vector<128x256xf32>
    %8 = arith.truncf %7 : vector<128x256xf32> to vector<128x256xbf16>
    %c0_6 = arith.constant 0 : index
    %c0_7 = arith.constant 0 : index
    %9 = vector.load %arg4[%c0_6, %c0_7] : memref<256x256xbf16, #tpu.memory_space<vmem>>, vector<256x256xbf16>
    %c0_8 = arith.constant 0 : index
    %c0_9 = arith.constant 0 : index
    %10 = vector.load %arg5[%c0_8, %c0_9] : memref<1x256xf32, #tpu.memory_space<vmem>>, vector<1x256xf32>
    %cst_10 = arith.constant dense<0.000000e+00> : vector<128x256xf32>
    %11 = tpu.matmul %8, %9, %cst_10 {dimension_numbers = #tpu.dot_dimension_numbers<[1], [0], [0], [1], [0, 0, 1, 1], [], []>} : vector<128x256xbf16>, vector<256x256xbf16>, vector<128x256xf32> -> vector<128x256xf32>
    %12 = vector.broadcast %10 : vector<1x256xf32> to vector<128x256xf32>
    %13 = arith.addf %11, %12 : vector<128x256xf32>
    %cst_11 = arith.constant 0.000000e+00 : f32
    %14 = vector.broadcast %cst_11 : f32 to vector<128x256xf32>
    %15 = arith.maximumf %13, %14 : vector<128x256xf32>
    %16 = arith.truncf %15 : vector<128x256xf32> to vector<128x256xbf16>
    %c0_12 = arith.constant 0 : index
    %c0_13 = arith.constant 0 : index
    %17 = vector.load %arg6[%c0_12, %c0_13] : memref<256x256xbf16, #tpu.memory_space<vmem>>, vector<256x256xbf16>
    %c0_14 = arith.constant 0 : index
    %c0_15 = arith.constant 0 : index
    %18 = vector.load %arg7[%c0_14, %c0_15] : memref<1x256xf32, #tpu.memory_space<vmem>>, vector<1x256xf32>
    %cst_16 = arith.constant dense<0.000000e+00> : vector<128x256xf32>
    %19 = tpu.matmul %16, %17, %cst_16 {dimension_numbers = #tpu.dot_dimension_numbers<[1], [0], [0], [1], [0, 0, 1, 1], [], []>} : vector<128x256xbf16>, vector<256x256xbf16>, vector<128x256xf32> -> vector<128x256xf32>
    %20 = vector.broadcast %18 : vector<1x256xf32> to vector<128x256xf32>
    %21 = arith.addf %19, %20 : vector<128x256xf32>
    %cst_17 = arith.constant 0.000000e+00 : f32
    %22 = vector.broadcast %cst_17 : f32 to vector<128x256xf32>
    %23 = arith.maximumf %21, %22 : vector<128x256xf32>
    %24 = arith.truncf %23 : vector<128x256xf32> to vector<128x256xbf16>
    %c0_18 = arith.constant 0 : index
    %c0_19 = arith.constant 0 : index
    %25 = vector.load %arg8[%c0_18, %c0_19] : memref<256x128xbf16, #tpu.memory_space<vmem>>, vector<256x128xbf16>
    %c0_20 = arith.constant 0 : index
    %c0_21 = arith.constant 0 : index
    %26 = vector.load %arg9[%c0_20, %c0_21] : memref<1x128xf32, #tpu.memory_space<vmem>>, vector<1x128xf32>
    %cst_22 = arith.constant dense<0.000000e+00> : vector<128x128xf32>
    %27 = tpu.matmul %24, %25, %cst_22 {dimension_numbers = #tpu.dot_dimension_numbers<[1], [0], [0], [1], [0, 0, 1, 1], [], []>} : vector<128x256xbf16>, vector<256x128xbf16>, vector<128x128xf32> -> vector<128x128xf32>
    %28 = vector.broadcast %26 : vector<1x128xf32> to vector<128x128xf32>
    %29 = arith.addf %27, %28 : vector<128x128xf32>
    %c0_23 = arith.constant 0 : index
    %c0_24 = arith.constant 0 : index
    %30 = vector.load %arg10[%c0_23, %c0_24] : memref<128x128xf32, #tpu.memory_space<vmem>>, vector<128x128xf32>
    tpu.vector_store %arg10[%c0_23, %c0_24], %29 {strides = array<i32>} : memref<128x128xf32, #tpu.memory_space<vmem>>, vector<128x128xf32>,
    return
  }
  func.func @transform_0(%arg0: i32) -> (i32, i32) {
    %c0_i32 = arith.constant 0 : i32
    %c0_i32_0 = arith.constant 0 : i32
    return %arg0, %c0_i32 : i32, i32
  }
  func.func @transform_1(%arg0: i32) -> (i32, i32) {
    %c0_i32 = arith.constant 0 : i32
    %c0_i32_0 = arith.constant 0 : i32
    %c0_i32_1 = arith.constant 0 : i32
    return %c0_i32, %c0_i32_0 : i32, i32
  }
  func.func @transform_2(%arg0: i32) -> (i32, i32) {
    %c0_i32 = arith.constant 0 : i32
    %c0_i32_0 = arith.constant 0 : i32
    %c0_i32_1 = arith.constant 0 : i32
    return %c0_i32, %c0_i32_0 : i32, i32
  }
  func.func @transform_3(%arg0: i32) -> (i32, i32) {
    %c0_i32 = arith.constant 0 : i32
    %c0_i32_0 = arith.constant 0 : i32
    %c0_i32_1 = arith.constant 0 : i32
    return %c0_i32, %c0_i32_0 : i32, i32
  }
  func.func @transform_4(%arg0: i32) -> (i32, i32) {
    %c0_i32 = arith.constant 0 : i32
    %c0_i32_0 = arith.constant 0 : i32
    %c0_i32_1 = arith.constant 0 : i32
    return %c0_i32, %c0_i32_0 : i32, i32
  }
  func.func @transform_5(%arg0: i32) -> (i32, i32) {
    %c0_i32 = arith.constant 0 : i32
    %c0_i32_0 = arith.constant 0 : i32
    %c0_i32_1 = arith.constant 0 : i32
    return %c0_i32, %c0_i32_0 : i32, i32
  }
  func.func @transform_6(%arg0: i32) -> (i32, i32) {
    %c0_i32 = arith.constant 0 : i32
    %c0_i32_0 = arith.constant 0 : i32
    %c0_i32_1 = arith.constant 0 : i32
    return %c0_i32, %c0_i32_0 : i32, i32
  }
  func.func @transform_7(%arg0: i32) -> (i32, i32) {
    %c0_i32 = arith.constant 0 : i32
    %c0_i32_0 = arith.constant 0 : i32
    %c0_i32_1 = arith.constant 0 : i32
    return %c0_i32, %c0_i32_0 : i32, i32
  }
  func.func @transform_8(%arg0: i32) -> (i32, i32) {
    %c0_i32 = arith.constant 0 : i32
    %c0_i32_0 = arith.constant 0 : i32
    %c0_i32_1 = arith.constant 0 : i32
    return %c0_i32, %c0_i32_0 : i32, i32
  }
  func.func @transform_9(%arg0: i32) -> (i32, i32) {
    %c0_i32 = arith.constant 0 : i32
    %c0_i32_0 = arith.constant 0 : i32
    return %arg0, %c0_i32 : i32, i32
  }
}

</mosaic_0001>

<llo_original>
// kernel: tpu_custom_call.1
$region0: #{tpu_custom_call.1}
  #allocation0 [shape = 'u32[]', space=smem, size = 0x4, offset = 0x4, fixed_abs, tag = 'smem constant byte address 0x4 - core index']
  #allocation1 [shape = 'u32[72,128]{1,0:T(1,128)}', space=vmem, size = 0x9000, scoped, tag = 'internal scratch']
  %s0 = inlined_call_operand.vmem [shape: bf16[256,64], index: 0, kind: input, shape index: {}]
  %s1 = inlined_call_operand.vmem [shape: bf16[64,256], index: 1, kind: input, shape index: {}]
  %s2 = inlined_call_operand.vmem [shape: f32[1,256], index: 2, kind: input, shape index: {}]
  %s3 = inlined_call_operand.hbm [shape: bf16[256,256], index: 3, kind: input, shape index: {}]
  %s4 = inlined_call_operand.vmem [shape: f32[1,256], index: 4, kind: input, shape index: {}]
  %s5 = inlined_call_operand.hbm [shape: bf16[256,256], index: 5, kind: input, shape index: {}]
  %s6 = inlined_call_operand.vmem [shape: f32[1,256], index: 6, kind: input, shape index: {}]
  %s7 = inlined_call_operand.vmem [shape: bf16[256,128], index: 7, kind: input, shape index: {}]
  %s8 = inlined_call_operand.hbm [shape: f32[1,128], index: 8, kind: input, shape index: {}]
  %s9 = inlined_call_operand.hbm [shape: f32[256,128], index: 9, kind: output, shape index: {}]
  %s10 = sld [smem:[#allocation0]]
  $region81: #{tpu_custom_call.1} parent=0
    _
  %s12 = ssub.s32 1, %s10
  %s13 = scalar_select 0, %s12, %s10
  $region1: #{tpu_custom_call.1} parent=0
    #allocation2 [shape = 'u8[131072]{0}', space=vmem, size = 0x20000, scoped, tag = 'input window, operand 3, single buffered']
    #allocation3 [shape = 's32[2]{0}', space=sflag, size = 0x8, scoped, tag = 'scoped memory for tpu_custom_call.1']
    #allocation4 [shape = 's32[2]{0}', space=sflag, size = 0x8, scoped, tag = 'scoped memory for tpu_custom_call.1']
    #allocation5 [shape = 'u8[131072]{0}', space=vmem, size = 0x20000, scoped, tag = 'input window, operand 5, single buffered']
    #allocation6 [shape = 's32[1]{0}', space=sflag, size = 0x4, scoped, tag = 'scoped memory for tpu_custom_call.1']
    #allocation7 [shape = 'u8[512]{0}', space=vmem, size = 0x400, scoped, tag = 'input window, operand 8, single buffered']
    #allocation8 [shape = 'u8[131072]{0}', space=vmem, size = 0x20000, scoped, tag = 'output window, operand 0']
    %14 = vsyncpa [#allocation3], 0
    %15 = vsyncpa [#allocation6], 0
    %16 = vsyncpa [#allocation4], 0
    %s17 = scalar_lea.sflag [#allocation4], 1
    %18 = vsyncpa %s17, 0
    loop: start=0, step=1, limit=4
    $region2: #{tpu_custom_call.1} parent=1 // loop_pre_header
      _
    $region3: #{tpu_custom_call.1} parent=1 // loop_header
      %s20 = sphi 0, %s24
      %p21 = scmp.ge.s32.totalorder %s20, 4
      %s30 = sphi 0, %s32
      %s33 = sphi 0, %s30
      %s34 = sphi 0, %s33
      %s50 = sphi 0, %s34
      %s54 = sphi 0, %s54
      %s56 = sphi 0, %s54
      %s57 = sphi 0, %s56
      %s71 = sphi 0, %s57
      %s75 = sphi 0, %s75
      %s77 = sphi 0, %s75
      %s78 = sphi 0, %s77
      %s92 = sphi 0, %s78
      %s96 = sphi 0, %s96
      %s98 = sphi 0, %s96
      %s99 = sphi 0, %s98
      %s113 = sphi 0, %s99
      %s117 = sphi 0, %s117
      %s119 = sphi 0, %s117
      %s120 = sphi 0, %s119
      %s134 = sphi 0, %s120
      %s138 = sphi 0, %s138
      %s140 = sphi 0, %s138
      %s141 = sphi 0, %s140
      %s155 = sphi 0, %s141
      %s159 = sphi 0, %s159
      %s161 = sphi 0, %s159
      %s162 = sphi 0, %s161
      %s176 = sphi 0, %s162
      %s180 = sphi 0, %s180
      %s182 = sphi 0, %s180
      %s183 = sphi 0, %s182
      %s197 = sphi 0, %s183
      %s201 = sphi 0, %s201
      %s203 = sphi 0, %s201
      %s204 = sphi 0, %s203
      %s218 = sphi 0, %s204
      %s224 = sphi 0, %s226
      %s227 = sphi 0, %s224
      %s228 = sphi 0, %s227
      %s244 = sphi 0, %s228
    $region4: #{tpu_custom_call.1} parent=1 // loop_header_branch
      %23 = sbr.rel (%p21) target = $region8
    $region5: #{tpu_custom_call.1} parent=1 // loop_body
      %s25 = ssub.s32 %s20, 1
      %s26 = ssub.s32 %s20, 2
      %s27 = sadd.s32 %s20, 1
      %s28 = ssub.s32 %s20, %s27
      %p29 = scmp.eq.s32.totalorder %s28, 0
      %s31 = sadd.s32 %s30, 1
      %s32 = scalar_select %p29, %s30, %s31
      %p35 = pneg %p29
      %p36 = scmp.eq.s32.totalorder %s20, 1
      %p37 = por %p35, %p36
      %p38 = scmp.ne.s32.totalorder %s30, %s33
      %p39 = scmp.eq.s32.totalorder %s20, 0
      %p40 = por %p38, %p39
      %p41 = scmp.ne.s32.totalorder %s30, %s33
      %p42 = scmp.eq.s32.totalorder %s25, 1
      %p43 = por %p41, %p42
      %p44 = scmp.ne.s32.totalorder %s33, %s34
      %p45 = scmp.eq.s32.totalorder %s25, 0
      %p46 = por %p44, %p45
      %p47 = scmp.ne.s32.totalorder %s33, %s34
      %p48 = scmp.eq.s32.totalorder %s26, 1
      %p49 = por %p47, %p48
      %p51 = scmp.ne.s32.totalorder %s34, %s50
      %p52 = scmp.eq.s32.totalorder %s26, 0
      %p53 = por %p51, %p52
      %s55 = sadd.s32 %s54, 1
      %p58 = scmp.eq.s32.totalorder %s20, 1
      %p59 = scmp.ne.s32.totalorder %s54, %s56
      %p60 = scmp.eq.s32.totalorder %s20, 0
      %p61 = por %p59, %p60
      %p62 = scmp.ne.s32.totalorder %s54, %s56
      %p63 = scmp.eq.s32.totalorder %s25, 1
      %p64 = por %p62, %p63
      %p65 = scmp.ne.s32.totalorder %s56, %s57
      %p66 = scmp.eq.s32.totalorder %s25, 0
      %p67 = por %p65, %p66
      %p68 = scmp.ne.s32.totalorder %s56, %s57
      %p69 = scmp.eq.s32.totalorder %s26, 1
      %p70 = por %p68, %p69
      %p72 = scmp.ne.s32.totalorder %s57, %s71
      %p73 = scmp.eq.s32.totalorder %s26, 0
      %p74 = por %p72, %p73
      %s76 = sadd.s32 %s75, 1
      %p79 = scmp.eq.s32.totalorder %s20, 1
      %p80 = scmp.ne.s32.totalorder %s75, %s77
      %p81 = scmp.eq.s32.totalorder %s20, 0
      %p82 = por %p80, %p81
      %p83 = scmp.ne.s32.totalorder %s75, %s77
      %p84 = scmp.eq.s32.totalorder %s25, 1
      %p85 = por %p83, %p84
      %p86 = scmp.ne.s32.totalorder %s77, %s78
      %p87 = scmp.eq.s32.totalorder %s25, 0
      %p88 = por %p86, %p87
      %p89 = scmp.ne.s32.totalorder %s77, %s78
      %p90 = scmp.eq.s32.totalorder %s26, 1
      %p91 = por %p89, %p90
      %p93 = scmp.ne.s32.totalorder %s78, %s92
      %p94 = scmp.eq.s32.totalorder %s26, 0
      %p95 = por %p93, %p94
      %s97 = sadd.s32 %s96, 1
      %p100 = scmp.eq.s32.totalorder %s20, 1
      %p101 = scmp.ne.s32.totalorder %s96, %s98
      %p102 = scmp.eq.s32.totalorder %s20, 0
      %p103 = por %p101, %p102
      %p104 = scmp.ne.s32.totalorder %s96, %s98
      %p105 = scmp.eq.s32.totalorder %s25, 1
      %p106 = por %p104, %p105
      %p107 = scmp.ne.s32.totalorder %s98, %s99
      %p108 = scmp.eq.s32.totalorder %s25, 0
      %p109 = por %p107, %p108
      %p110 = scmp.ne.s32.totalorder %s98, %s99
      %p111 = scmp.eq.s32.totalorder %s26, 1
      %p112 = por %p110, %p111
      %p114 = scmp.ne.s32.totalorder %s99, %s113
      %p115 = scmp.eq.s32.totalorder %s26, 0
      %p116 = por %p114, %p115
      %s118 = sadd.s32 %s117, 1
      %p121 = scmp.eq.s32.totalorder %s20, 1
      %p122 = scmp.ne.s32.totalorder %s117, %s119
      %p123 = scmp.eq.s32.totalorder %s20, 0
      %p124 = por %p122, %p123
      %p125 = scmp.ne.s32.totalorder %s117, %s119
      %p126 = scmp.eq.s32.totalorder %s25, 1
      %p127 = por %p125, %p126
      %p128 = scmp.ne.s32.totalorder %s119, %s120
      %p129 = scmp.eq.s32.totalorder %s25, 0
      %p130 = por %p128, %p129
      %p131 = scmp.ne.s32.totalorder %s119, %s120
      %p132 = scmp.eq.s32.totalorder %s26, 1
      %p133 = por %p131, %p132
      %p135 = scmp.ne.s32.totalorder %s120, %s134
      %p136 = scmp.eq.s32.totalorder %s26, 0
      %p137 = por %p135, %p136
      %s139 = sadd.s32 %s138, 1
      %p142 = scmp.eq.s32.totalorder %s20, 1
      %p143 = scmp.ne.s32.totalorder %s138, %s140
      %p144 = scmp.eq.s32.totalorder %s20, 0
      %p145 = por %p143, %p144
      %p146 = scmp.ne.s32.totalorder %s138, %s140
      %p147 = scmp.eq.s32.totalorder %s25, 1
      %p148 = por %p146, %p147
      %p149 = scmp.ne.s32.totalorder %s140, %s141
      %p150 = scmp.eq.s32.totalorder %s25, 0
      %p151 = por %p149, %p150
      %p152 = scmp.ne.s32.totalorder %s140, %s141
      %p153 = scmp.eq.s32.totalorder %s26, 1
      %p154 = por %p152, %p153
      %p156 = scmp.ne.s32.totalorder %s141, %s155
      %p157 = scmp.eq.s32.totalorder %s26, 0
      %p158 = por %p156, %p157
      %s160 = sadd.s32 %s159, 1
      %p163 = scmp.eq.s32.totalorder %s20, 1
      %p164 = scmp.ne.s32.totalorder %s159, %s161
      %p165 = scmp.eq.s32.totalorder %s20, 0
      %p166 = por %p164, %p165
      %p167 = scmp.ne.s32.totalorder %s159, %s161
      %p168 = scmp.eq.s32.totalorder %s25, 1
      %p169 = por %p167, %p168
      %p170 = scmp.ne.s32.totalorder %s161, %s162
      %p171 = scmp.eq.s32.totalorder %s25, 0
      %p172 = por %p170, %p171
      %p173 = scmp.ne.s32.totalorder %s161, %s162
      %p174 = scmp.eq.s32.totalorder %s26, 1
      %p175 = por %p173, %p174
      %p177 = scmp.ne.s32.totalorder %s162, %s176
      %p178 = scmp.eq.s32.totalorder %s26, 0
      %p179 = por %p177, %p178
      %s181 = sadd.s32 %s180, 1
      %p184 = scmp.eq.s32.totalorder %s20, 1
      %p185 = scmp.ne.s32.totalorder %s180, %s182
      %p186 = scmp.eq.s32.totalorder %s20, 0
      %p187 = por %p185, %p186
      %p188 = scmp.ne.s32.totalorder %s180, %s182
      %p189 = scmp.eq.s32.totalorder %s25, 1
      %p190 = por %p188, %p189
      %p191 = scmp.ne.s32.totalorder %s182, %s183
      %p192 = scmp.eq.s32.totalorder %s25, 0
      %p193 = por %p191, %p192
      %p194 = scmp.ne.s32.totalorder %s182, %s183
      %p195 = scmp.eq.s32.totalorder %s26, 1
      %p196 = por %p194, %p195
      %p198 = scmp.ne.s32.totalorder %s183, %s197
      %p199 = scmp.eq.s32.totalorder %s26, 0
      %p200 = por %p198, %p199
      %s202 = sadd.s32 %s201, 1
      %p205 = scmp.eq.s32.totalorder %s20, 1
      %p206 = scmp.ne.s32.totalorder %s201, %s203
      %p207 = scmp.eq.s32.totalorder %s20, 0
      %p208 = por %p206, %p207
      %p209 = scmp.ne.s32.totalorder %s201, %s203
      %p210 = scmp.eq.s32.totalorder %s25, 1
      %p211 = por %p209, %p210
      %p212 = scmp.ne.s32.totalorder %s203, %s204
      %p213 = scmp.eq.s32.totalorder %s25, 0
      %p214 = por %p212, %p213
      %p215 = scmp.ne.s32.totalorder %s203, %s204
      %p216 = scmp.eq.s32.totalorder %s26, 1
      %p217 = por %p215, %p216
      %p219 = scmp.ne.s32.totalorder %s204, %s218
      %p220 = scmp.eq.s32.totalorder %s26, 0
      %p221 = por %p219, %p220
      %s222 = ssub.s32 %s20, %s27
      %p223 = scmp.eq.s32.totalorder %s222, 0
      %s225 = sadd.s32 %s224, 1
      %s226 = scalar_select %p223, %s224, %s225
      %p229 = pneg %p223
      %p230 = scmp.eq.s32.totalorder %s20, 1
      %p231 = por %p229, %p230
      %p232 = scmp.ne.s32.totalorder %s224, %s227
      %p233 = scmp.eq.s32.totalorder %s20, 0
      %p234 = por %p232, %p233
      %p235 = scmp.ne.s32.totalorder %s224, %s227
      %p236 = scmp.eq.s32.totalorder %s25, 1
      %p237 = por %p235, %p236
      %p238 = scmp.ne.s32.totalorder %s227, %s228
      %p239 = scmp.eq.s32.totalorder %s25, 0
      %p240 = por %p238, %p239
      %p241 = scmp.ne.s32.totalorder %s227, %s228
      %p242 = scmp.eq.s32.totalorder %s26, 1
      %p243 = por %p241, %p242
      %p245 = scmp.ne.s32.totalorder %s228, %s244
      %p246 = scmp.eq.s32.totalorder %s26, 0
      %p247 = por %p245, %p246
      %p248 = scmp.le.s32.totalorder 1, %s20
      %p249 = scmp.lt.s32.totalorder %s20, 3
      %p250 = pnand %p248, %p249
      %p251 = pneg %p250
      // Predicated region
      $region9: #{tpu_custom_call.1} parent=5 // pred_check
        _
      $region10: #{tpu_custom_call.1} parent=5 // pred_check_branch
        %253 = sbr.rel (%p250) target = $region12
      $region11: #{tpu_custom_call.1} parent=5 // pred_region
        %s254 = ssub.s32 %s20, 1
        // Predicated region
        $region13: #{tpu_custom_call.1} parent=11 // pred_check
          %p255 = pneg %p67
        $region14: #{tpu_custom_call.1} parent=11 // pred_check_branch
          %257 = sbr.rel (%p255) target = $region16
        $region15: #{tpu_custom_call.1} parent=11 // pred_region
          _
        $region16: #{tpu_custom_call.1} parent=11 // pred_fallthru
          _
        // Predicated region
        $region17: #{tpu_custom_call.1} parent=11 // pred_check
          %p258 = pneg %p88
        $region18: #{tpu_custom_call.1} parent=11 // pred_check_branch
          %260 = sbr.rel (%p258) target = $region20
        $region19: #{tpu_custom_call.1} parent=11 // pred_region
          _
        $region20: #{tpu_custom_call.1} parent=11 // pred_fallthru
          _
        // Predicated region
        $region21: #{tpu_custom_call.1} parent=11 // pred_check
          %p261 = pneg %p109
        $region22: #{tpu_custom_call.1} parent=11 // pred_check_branch
          %263 = sbr.rel (%p261) target = $region24
        $region23: #{tpu_custom_call.1} parent=11 // pred_region
          %265 = vsyncadd [#allocation3], 0
          %s266 = sshll.u32 %s3, 4
          %s267 = int_to_ptr.hbm [resolvable:$true] %s266
          %s268 = sshll.u32 [#allocation2], 4
          %s269 = int_to_ptr.vmem [resolvable:$true] %s268
          %274 = dma.hbm_to_vmem [thread:$0]  %s267, 4096, %s269, [#allocation3], 128, 128, 8
        $region24: #{tpu_custom_call.1} parent=11 // pred_fallthru
          _
        // Predicated region
        $region25: #{tpu_custom_call.1} parent=11 // pred_check
          %p275 = pneg %p130
        $region26: #{tpu_custom_call.1} parent=11 // pred_check_branch
          %277 = sbr.rel (%p275) target = $region28
        $region27: #{tpu_custom_call.1} parent=11 // pred_region
          _
        $region28: #{tpu_custom_call.1} parent=11 // pred_fallthru
          _
        // Predicated region
        $region29: #{tpu_custom_call.1} parent=11 // pred_check
          %p278 = pneg %p151
        $region30: #{tpu_custom_call.1} parent=11 // pred_check_branch
          %280 = sbr.rel (%p278) target = $region32
        $region31: #{tpu_custom_call.1} parent=11 // pred_region
          %282 = vsyncadd [#allocation6], 0
          %s283 = sshll.u32 %s5, 4
          %s284 = int_to_ptr.hbm [resolvable:$true] %s283
          %s285 = sshll.u32 [#allocation5], 4
          %s286 = int_to_ptr.vmem [resolvable:$true] %s285
          %291 = dma.hbm_to_vmem [thread:$0]  %s284, 4096, %s286, [#allocation6], 128, 128, 8
        $region32: #{tpu_custom_call.1} parent=11 // pred_fallthru
          _
        // Predicated region
        $region33: #{tpu_custom_call.1} parent=11 // pred_check
          %p292 = pneg %p172
        $region34: #{tpu_custom_call.1} parent=11 // pred_check_branch
          %294 = sbr.rel (%p292) target = $region36
        $region35: #{tpu_custom_call.1} parent=11 // pred_region
          _
        $region36: #{tpu_custom_call.1} parent=11 // pred_fallthru
          _
        // Predicated region
        $region37: #{tpu_custom_call.1} parent=11 // pred_check
          %p295 = pneg %p193
        $region38: #{tpu_custom_call.1} parent=11 // pred_check_branch
          %297 = sbr.rel (%p295) target = $region40
        $region39: #{tpu_custom_call.1} parent=11 // pred_region
          _
        $region40: #{tpu_custom_call.1} parent=11 // pred_fallthru
          _
        // Predicated region
        $region41: #{tpu_custom_call.1} parent=11 // pred_check
          %p298 = pneg %p214
        $region42: #{tpu_custom_call.1} parent=11 // pred_check_branch
          %300 = sbr.rel (%p298) target = $region44
        $region43: #{tpu_custom_call.1} parent=11 // pred_region
          %302 = vsyncadd [#allocation6], 0
          %s304 = sshll.u32 %s8, 4
          %s305 = int_to_ptr.hbm [resolvable:$true] %s304
          %s306 = sshll.u32 [#allocation7], 4
          %s307 = int_to_ptr.vmem [resolvable:$true] %s306
          %309 = dma.hbm_to_vmem [thread:$0]  %s305, 16, %s307, [#allocation6]
        $region44: #{tpu_custom_call.1} parent=11 // pred_fallthru
          _
      $region12: #{tpu_custom_call.1} parent=5 // pred_fallthru
        _
      %p310 = scmp.lt.s32.totalorder %s20, 2
      // Predicated region
      $region45: #{tpu_custom_call.1} parent=5 // pred_check
        %p311 = pneg %p310
      $region46: #{tpu_custom_call.1} parent=5 // pred_check_branch
        %313 = sbr.rel (%p311) target = $region48
      $region47: #{tpu_custom_call.1} parent=5 // pred_region
        // Predicated region
        $region49: #{tpu_custom_call.1} parent=47 // pred_check
          %p314 = pneg %p40
        $region50: #{tpu_custom_call.1} parent=47 // pred_check_branch
          %316 = sbr.rel (%p314) target = $region52
        $region51: #{tpu_custom_call.1} parent=47 // pred_region
          %s317 = smul.u32 16, %s20
          %p318 = scmp.lt.s32.totalorder %s317, 31
          %s319 = scalar_select %p318, %s317, 31
          %s320 = smul.addr %s319, 4
          %s321 = scalar_lea.vmem %s0, %s320
          %s322 = smul.u32 16, %s20
        $region52: #{tpu_custom_call.1} parent=47 // pred_fallthru
          _
      $region48: #{tpu_custom_call.1} parent=5 // pred_fallthru
        _
      %p323 = scmp.le.s32.totalorder 1, %s20
      %p324 = scmp.lt.s32.totalorder %s20, 3
      %p325 = pnand %p323, %p324
      %p326 = pneg %p325
      // Predicated region
      $region53: #{tpu_custom_call.1} parent=5 // pred_check
        _
      $region54: #{tpu_custom_call.1} parent=5 // pred_check_branch
        %328 = sbr.rel (%p325) target = $region56
      $region55: #{tpu_custom_call.1} parent=5 // pred_region
        %s329 = ssub.s32 %s20, 1
        // Predicated region
        $region57: #{tpu_custom_call.1} parent=55 // pred_check
          %p330 = pneg %p109
        $region58: #{tpu_custom_call.1} parent=55 // pred_check_branch
          %332 = sbr.rel (%p330) target = $region60
        $region59: #{tpu_custom_call.1} parent=55 // pred_region
          %334 = dma.done [#allocation3], 4096
        $region60: #{tpu_custom_call.1} parent=55 // pred_fallthru
          _
        // Predicated region
        $region61: #{tpu_custom_call.1} parent=55 // pred_check
          %p335 = pneg %p151
        $region62: #{tpu_custom_call.1} parent=55 // pred_check_branch
          %337 = sbr.rel (%p335) target = $region64
        $region63: #{tpu_custom_call.1} parent=55 // pred_region
          %339 = dma.done [#allocation6], 4096
        $region64: #{tpu_custom_call.1} parent=55 // pred_fallthru
          _
        // Predicated region
        $region65: #{tpu_custom_call.1} parent=55 // pred_check
          %p340 = pneg %p214
        $region66: #{tpu_custom_call.1} parent=55 // pred_check_branch
          %342 = sbr.rel (%p340) target = $region68
        $region67: #{tpu_custom_call.1} parent=55 // pred_region
          %344 = dma.done [#allocation6], 16
        $region68: #{tpu_custom_call.1} parent=55 // pred_fallthru
          _
        %s345 = smul.u32 16, %s25
        %p346 = scmp.lt.s32.totalorder %s345, 31
        %s347 = scalar_select %p346, %s345, 31
        %s348 = smul.addr %s347, 4
        %s349 = scalar_lea.vmem %s0, %s348
        %p350 = pneg %p46
        %p351 = pneg %p43
        %p352 = pneg %p67
        %p353 = pneg %p64
        %p354 = pneg %p88
        %p355 = pneg %p85
        %p356 = pneg %p109
        %p357 = pneg %p106
        %p358 = pneg %p130
        %p359 = pneg %p127
        %p360 = pneg %p151
        %p361 = pneg %p148
        %p362 = pneg %p172
        %p363 = pneg %p169
        %p364 = pneg %p193
        %p365 = pneg %p190
        %p366 = pneg %p214
        %p367 = pneg %p211
        %p368 = pneg %p240
        %p369 = pneg %p237
        %s370 = sand.u32 %s227, 1
        %s371 = scalar_lea.sflag [#allocation4], %s370
        %s372 = sand.u32 %s227, 1
        %s373 = smul.addr %s372, 128
        %s374 = scalar_lea.vmem [#allocation8], %s373
        %s375 = smul.u32 16, %s25
        %p376 = scmp.lt.s32.totalorder %s375, 31
        %s377 = scalar_select %p376, %s375, 31
        %s378 = smul.addr %s377, 4
        %s379 = scalar_lea.vmem %s0, %s378
        %s380 = smul.u32 16, %s25
        %s381 = smul.u32 16, %s25
        %v383 = vld [vmem:[%s379] sm:$0xf]
        %v384 = vld [vmem:[%s379 + $0x4] sm:$0xf]
        %v385 = vld [vmem:[%s379 + $0x8] sm:$0xf]
        %v386 = vld [vmem:[%s379 + $0xc] sm:$0xf]
        %v387 = vld [vmem:[%s379 + $0x10] sm:$0xf]
        %v388 = vld [vmem:[%s379 + $0x14] sm:$0xf]
        %v389 = vld [vmem:[%s379 + $0x18] sm:$0xf]
        %v390 = vld [vmem:[%s379 + $0x1c] sm:$0xf]
        %v391 = vld [vmem:[%s379 + $0x20] sm:$0xf]
        %v392 = vld [vmem:[%s379 + $0x24] sm:$0xf]
        %v393 = vld [vmem:[%s379 + $0x28] sm:$0xf]
        %v394 = vld [vmem:[%s379 + $0x2c] sm:$0xf]
        %v395 = vld [vmem:[%s379 + $0x30] sm:$0xf]
        %v396 = vld [vmem:[%s379 + $0x34] sm:$0xf]
        %v397 = vld [vmem:[%s379 + $0x38] sm:$0xf]
        %v398 = vld [vmem:[%s379 + $0x3c] sm:$0xf]
        %v399 = vld [vmem:[%s1] sm:$0xff]
        %v400 = vld [vmem:[%s1 + $0x8] sm:$0xff]
        %v401 = vld [vmem:[%s1 + $0x10] sm:$0xff]
        %v402 = vld [vmem:[%s1 + $0x18] sm:$0xff]
        %v403 = vld [vmem:[%s1 + $0x20] sm:$0xff]
        %v404 = vld [vmem:[%s1 + $0x28] sm:$0xff]
        %v405 = vld [vmem:[%s1 + $0x30] sm:$0xff]
        %v406 = vld [vmem:[%s1 + $0x38] sm:$0xff]
        %v407 = vld [vmem:[%s2] sm:$0x3]
        %v409 = vperm.slane %v407, 0
        %v410 = vperm.slane %v407, 1
        %v429 = vunpack.c.l.b16 %v383
        %v430 = vunpack.c.l.b16 %v384
        %v431 = vunpack.c.l.b16 %v385
        %v432 = vunpack.c.l.b16 %v386
        %v433 = vunpack.c.l.b16 %v387
        %v434 = vunpack.c.l.b16 %v388
        %v435 = vunpack.c.l.b16 %v389
        %v436 = vunpack.c.l.b16 %v390
        %v437 = vunpack.c.l.b16 %v391
        %v438 = vunpack.c.l.b16 %v392
        %v439 = vunpack.c.l.b16 %v393
        %v440 = vunpack.c.l.b16 %v394
        %v441 = vunpack.c.l.b16 %v395
        %v442 = vunpack.c.l.b16 %v396
        %v443 = vunpack.c.l.b16 %v397
        %v444 = vunpack.c.l.b16 %v398
        %v445 = vpack.c.b16 %v430, %v429
        %v446 = vpack.c.b16 %v432, %v431
        %v447 = vpack.c.b16 %v434, %v433
        %v448 = vpack.c.b16 %v436, %v435
        %v449 = vpack.c.b16 %v438, %v437
        %v450 = vpack.c.b16 %v440, %v439
        %v451 = vpack.c.b16 %v442, %v441
        %v452 = vpack.c.b16 %v444, %v443
        %v461 = vunpack.c.l.b16 %v399
        %v462 = vunpack.c.h.b16 %v399
        %v463 = vunpack.c.l.b16 %v400
        %v464 = vunpack.c.h.b16 %v400
        %v465 = vunpack.c.l.b16 %v401
        %v466 = vunpack.c.h.b16 %v401
        %v467 = vunpack.c.l.b16 %v402
        %v468 = vunpack.c.h.b16 %v402
        %v469 = vunpack.c.l.b16 %v403
        %v470 = vunpack.c.h.b16 %v403
        %v471 = vunpack.c.l.b16 %v404
        %v472 = vunpack.c.h.b16 %v404
        %v473 = vunpack.c.l.b16 %v405
        %v474 = vunpack.c.h.b16 %v405
        %v475 = vunpack.c.l.b16 %v406
        %v476 = vunpack.c.h.b16 %v406
        %v477 = vpack.c.b16 %v463, %v461
        %v478 = vpack.c.b16 %v464, %v462
        %v479 = vpack.c.b16 %v467, %v465
        %v480 = vpack.c.b16 %v468, %v466
        %v481 = vpack.c.b16 %v471, %v469
        %v482 = vpack.c.b16 %v472, %v470
        %v483 = vpack.c.b16 %v475, %v473
        %v484 = vpack.c.b16 %v476, %v474
        %vm493 = vcmask 523264
        %v495 = vsel %vm493, %v445, 0
        %v498 = vsel %vm493, %v446, 0
        %v501 = vsel %vm493, %v447, 0
        %v504 = vsel %vm493, %v448, 0
        %v507 = vsel %vm493, %v449, 0
        %v510 = vsel %vm493, %v450, 0
        %v513 = vsel %vm493, %v451, 0
        %v516 = vsel %vm493, %v452, 0
        %518 = vmatpush.bf16.msra.mxu0 0
        %519 = vmatpush.bf16.msra.mxu0 0
        %520 = vmatpush.bf16.msra.mxu0 0
        %521 = vmatpush.bf16.msra.mxu0 0
        %522 = vmatpush.bf16.msra.mxu0 %v483
        %523 = vmatpush.bf16.msra.mxu0 %v481
        %524 = vmatpush.bf16.msra.mxu0 %v479
        %525 = vmatpush.bf16.msra.mxu0 %v477
        %526 = vmatmul.bf16.gmra.mxu0 %v495
        %v527 = vpop.f32.mrf.mxu0
        %v528 = vadd.f32 %v409, %v527
        %v529 = vpop.f32.mrf.mxu0
        %v530 = vadd.f32 %v409, %v529
        %531 = vmatmul.bf16.gmra.mxu0 %v498
        %v532 = vpop.f32.mrf.mxu0
        %v533 = vadd.f32 %v409, %v532
        %v534 = vpop.f32.mrf.mxu0
        %v535 = vadd.f32 %v409, %v534
        %536 = vmatmul.bf16.gmra.mxu0 %v501
        %v537 = vpop.f32.mrf.mxu0
        %v538 = vadd.f32 %v409, %v537
        %v539 = vpop.f32.mrf.mxu0
        %v540 = vadd.f32 %v409, %v539
        %541 = vmatmul.bf16.gmra.mxu0 %v504
        %v542 = vpop.f32.mrf.mxu0
        %v543 = vadd.f32 %v409, %v542
        %v544 = vpop.f32.mrf.mxu0
        %v545 = vadd.f32 %v409, %v544
        %546 = vmatmul.bf16.gmra.mxu0 %v507
        %v547 = vpop.f32.mrf.mxu0
        %v548 = vadd.f32 %v409, %v547
        %v549 = vpop.f32.mrf.mxu0
        %v550 = vadd.f32 %v409, %v549
        %551 = vmatmul.bf16.gmra.mxu0 %v510
        %v552 = vpop.f32.mrf.mxu0
        %v553 = vadd.f32 %v409, %v552
        %v554 = vpop.f32.mrf.mxu0
        %v555 = vadd.f32 %v409, %v554
        %556 = vmatmul.bf16.gmra.mxu0 %v513
        %v557 = vpop.f32.mrf.mxu0
        %v558 = vadd.f32 %v409, %v557
        %v559 = vpop.f32.mrf.mxu0
        %v560 = vadd.f32 %v409, %v559
        %561 = vmatmul.bf16.gmra.mxu0 %v516
        %v562 = vpop.f32.mrf.mxu0
        %v563 = vadd.f32 %v409, %v562
        %v564 = vpop.f32.mrf.mxu0
        %v565 = vadd.f32 %v409, %v564
        %566 = vdwg.mxu0
        %567 = vmatpush.bf16.msra.mxu0 0
        %568 = vmatpush.bf16.msra.mxu0 0
        %569 = vmatpush.bf16.msra.mxu0 0
        %570 = vmatpush.bf16.msra.mxu0 0
        %571 = vmatpush.bf16.msra.mxu0 %v484
        %572 = vmatpush.bf16.msra.mxu0 %v482
        %573 = vmatpush.bf16.msra.mxu0 %v480
        %574 = vmatpush.bf16.msra.mxu0 %v478
        %575 = vmatmul.bf16.gmra.mxu0 %v495
        %v576 = vpop.f32.mrf.mxu0
        %v577 = vadd.f32 %v410, %v576
        %v578 = vpop.f32.mrf.mxu0
        %v579 = vadd.f32 %v410, %v578
        %580 = vmatmul.bf16.gmra.mxu0 %v498
        %v581 = vpop.f32.mrf.mxu0
        %v582 = vadd.f32 %v410, %v581
        %v583 = vpop.f32.mrf.mxu0
        %v584 = vadd.f32 %v410, %v583
        %585 = vmatmul.bf16.gmra.mxu0 %v501
        %v586 = vpop.f32.mrf.mxu0
        %v587 = vadd.f32 %v410, %v586
        %v588 = vpop.f32.mrf.mxu0
        %v589 = vadd.f32 %v410, %v588
        %590 = vmatmul.bf16.gmra.mxu0 %v504
        %v591 = vpop.f32.mrf.mxu0
        %v592 = vadd.f32 %v410, %v591
        %v593 = vpop.f32.mrf.mxu0
        %v594 = vadd.f32 %v410, %v593
        %595 = vmatmul.bf16.gmra.mxu0 %v507
        %v596 = vpop.f32.mrf.mxu0
        %v597 = vadd.f32 %v410, %v596
        %v598 = vpop.f32.mrf.mxu0
        %v599 = vadd.f32 %v410, %v598
        %600 = vmatmul.bf16.gmra.mxu0 %v510
        %v601 = vpop.f32.mrf.mxu0
        %v602 = vadd.f32 %v410, %v601
        %v603 = vpop.f32.mrf.mxu0
        %v604 = vadd.f32 %v410, %v603
        %605 = vmatmul.bf16.gmra.mxu0 %v513
        %v606 = vpop.f32.mrf.mxu0
        %v607 = vadd.f32 %v410, %v606
        %v608 = vpop.f32.mrf.mxu0
        %v609 = vadd.f32 %v410, %v608
        %610 = vmatmul.bf16.gmra.mxu0 %v516
        %v611 = vpop.f32.mrf.mxu0
        %v612 = vadd.f32 %v410, %v611
        %v613 = vpop.f32.mrf.mxu0
        %v614 = vadd.f32 %v410, %v613
        %615 = vdwg.mxu0
        %v616 = vmax.f32 %v528, 0.0
        %v617 = vmax.f32 %v577, 0.0
        %v618 = vmax.f32 %v530, 0.0
        %v619 = vmax.f32 %v579, 0.0
        %v620 = vmax.f32 %v533, 0.0
        %v621 = vmax.f32 %v582, 0.0
        %v622 = vmax.f32 %v535, 0.0
        %v623 = vmax.f32 %v584, 0.0
        %v624 = vmax.f32 %v538, 0.0
        %v625 = vmax.f32 %v587, 0.0
        %v626 = vmax.f32 %v540, 0.0
        %v627 = vmax.f32 %v589, 0.0
        %v628 = vmax.f32 %v543, 0.0
        %v629 = vmax.f32 %v592, 0.0
        %v630 = vmax.f32 %v545, 0.0
        %v631 = vmax.f32 %v594, 0.0
        %v632 = vmax.f32 %v548, 0.0
        %v633 = vmax.f32 %v597, 0.0
        %v634 = vmax.f32 %v550, 0.0
        %v635 = vmax.f32 %v599, 0.0
        %v636 = vmax.f32 %v553, 0.0
        %v637 = vmax.f32 %v602, 0.0
        %v638 = vmax.f32 %v555, 0.0
        %v639 = vmax.f32 %v604, 0.0
        %v640 = vmax.f32 %v558, 0.0
        %v641 = vmax.f32 %v607, 0.0
        %v642 = vmax.f32 %v560, 0.0
        %v643 = vmax.f32 %v609, 0.0
        %v644 = vmax.f32 %v563, 0.0
        %v645 = vmax.f32 %v612, 0.0
        %v646 = vmax.f32 %v565, 0.0
        %v647 = vmax.f32 %v614, 0.0
        %v648 = vpack.c.bf16 %v618, %v616
        %v649 = vpack.c.bf16 %v619, %v617
        %v650 = vpack.c.bf16 %v622, %v620
        %v651 = vpack.c.bf16 %v623, %v621
        %v652 = vpack.c.bf16 %v626, %v624
        %v653 = vpack.c.bf16 %v627, %v625
        %v654 = vpack.c.bf16 %v630, %v628
        %v655 = vpack.c.bf16 %v631, %v629
        %v656 = vpack.c.bf16 %v634, %v632
        %v657 = vpack.c.bf16 %v635, %v633
        %v658 = vpack.c.bf16 %v638, %v636
        %v659 = vpack.c.bf16 %v639, %v637
        %v660 = vpack.c.bf16 %v642, %v640
        %v661 = vpack.c.bf16 %v643, %v641
        %v662 = vpack.c.bf16 %v646, %v644
        %v663 = vpack.c.bf16 %v647, %v645
        %v664 = vld [vmem:[#allocation2] sm:$0xff]
        %v665 = vld [vmem:[#allocation2 + $0x8] sm:$0xff]
        %v666 = vld [vmem:[#allocation2 + $0x10] sm:$0xff]
        %v667 = vld [vmem:[#allocation2 + $0x18] sm:$0xff]
        %v668 = vld [vmem:[#allocation2 + $0x20] sm:$0xff]
        %v669 = vld [vmem:[#allocation2 + $0x28] sm:$0xff]
        %v670 = vld [vmem:[#allocation2 + $0x30] sm:$0xff]
        %v671 = vld [vmem:[#allocation2 + $0x38] sm:$0xff]
        %v672 = vld [vmem:[#allocation2 + $0x40] sm:$0xff]
        %v673 = vld [vmem:[#allocation2 + $0x48] sm:$0xff]
        %v674 = vld [vmem:[#allocation2 + $0x50] sm:$0xff]
        %v675 = vld [vmem:[#allocation2 + $0x58] sm:$0xff]
        %v676 = vld [vmem:[#allocation2 + $0x60] sm:$0xff]
        %v677 = vld [vmem:[#allocation2 + $0x68] sm:$0xff]
        %v678 = vld [vmem:[#allocation2 + $0x70] sm:$0xff]
        %v679 = vld [vmem:[#allocation2 + $0x78] sm:$0xff]
        %v680 = vld [vmem:[#allocation2 + $0x80] sm:$0xff]
        %v681 = vld [vmem:[#allocation2 + $0x88] sm:$0xff]
        %v682 = vld [vmem:[#allocation2 + $0x90] sm:$0xff]
        %v683 = vld [vmem:[#allocation2 + $0x98] sm:$0xff]
        %v684 = vld [vmem:[#allocation2 + $0xa0] sm:$0xff]
        %v685 = vld [vmem:[#allocation2 + $0xa8] sm:$0xff]
        %v686 = vld [vmem:[#allocation2 + $0xb0] sm:$0xff]
        %v687 = vld [vmem:[#allocation2 + $0xb8] sm:$0xff]
        %v688 = vld [vmem:[#allocation2 + $0xc0] sm:$0xff]
        %v689 = vld [vmem:[#allocation2 + $0xc8] sm:$0xff]
        %v690 = vld [vmem:[#allocation2 + $0xd0] sm:$0xff]
        %v691 = vld [vmem:[#allocation2 + $0xd8] sm:$0xff]
        %v692 = vld [vmem:[#allocation2 + $0xe0] sm:$0xff]
        %v693 = vld [vmem:[#allocation2 + $0xe8] sm:$0xff]
        %v694 = vld [vmem:[#allocation2 + $0xf0] sm:$0xff]
        %v695 = vld [vmem:[#allocation2 + $0xf8] sm:$0xff]
        %v696 = vld [vmem:[%s4] sm:$0x3]
        %v698 = vperm.slane %v696, 0
        %v699 = vperm.slane %v696, 1
        %v734 = vunpack.c.l.b16 %v664
        %v735 = vunpack.c.h.b16 %v664
        %v736 = vunpack.c.l.b16 %v665
        %v737 = vunpack.c.h.b16 %v665
        %v738 = vunpack.c.l.b16 %v666
        %v739 = vunpack.c.h.b16 %v666
        %v740 = vunpack.c.l.b16 %v667
        %v741 = vunpack.c.h.b16 %v667
        %v742 = vunpack.c.l.b16 %v668
        %v743 = vunpack.c.h.b16 %v668
        %v744 = vunpack.c.l.b16 %v669
        %v745 = vunpack.c.h.b16 %v669
        %v746 = vunpack.c.l.b16 %v670
        %v747 = vunpack.c.h.b16 %v670
        %v748 = vunpack.c.l.b16 %v671
        %v749 = vunpack.c.h.b16 %v671
        %v750 = vunpack.c.l.b16 %v672
        %v751 = vunpack.c.h.b16 %v672
        %v752 = vunpack.c.l.b16 %v673
        %v753 = vunpack.c.h.b16 %v673
        %v754 = vunpack.c.l.b16 %v674
        %v755 = vunpack.c.h.b16 %v674
        %v756 = vunpack.c.l.b16 %v675
        %v757 = vunpack.c.h.b16 %v675
        %v758 = vunpack.c.l.b16 %v676
        %v759 = vunpack.c.h.b16 %v676
        %v760 = vunpack.c.l.b16 %v677
        %v761 = vunpack.c.h.b16 %v677
        %v762 = vunpack.c.l.b16 %v678
        %v763 = vunpack.c.h.b16 %v678
        %v764 = vunpack.c.l.b16 %v679
        %v765 = vunpack.c.h.b16 %v679
        %v766 = vunpack.c.l.b16 %v680
        %v767 = vunpack.c.h.b16 %v680
        %v768 = vunpack.c.l.b16 %v681
        %v769 = vunpack.c.h.b16 %v681
        %v770 = vunpack.c.l.b16 %v682
        %v771 = vunpack.c.h.b16 %v682
        %v772 = vunpack.c.l.b16 %v683
        %v773 = vunpack.c.h.b16 %v683
        %v774 = vunpack.c.l.b16 %v684
        %v775 = vunpack.c.h.b16 %v684
        %v776 = vunpack.c.l.b16 %v685
        %v777 = vunpack.c.h.b16 %v685
        %v778 = vunpack.c.l.b16 %v686
        %v779 = vunpack.c.h.b16 %v686
        %v780 = vunpack.c.l.b16 %v687
        %v781 = vunpack.c.h.b16 %v687
        %v782 = vunpack.c.l.b16 %v688
        %v783 = vunpack.c.h.b16 %v688
        %v784 = vunpack.c.l.b16 %v689
        %v785 = vunpack.c.h.b16 %v689
        %v786 = vunpack.c.l.b16 %v690
        %v787 = vunpack.c.h.b16 %v690
        %v788 = vunpack.c.l.b16 %v691
        %v789 = vunpack.c.h.b16 %v691
        %v790 = vunpack.c.l.b16 %v692
        %v791 = vunpack.c.h.b16 %v692
        %v792 = vunpack.c.l.b16 %v693
        %v793 = vunpack.c.h.b16 %v693
        %v794 = vunpack.c.l.b16 %v694
        %v795 = vunpack.c.h.b16 %v694
        %v796 = vunpack.c.l.b16 %v695
        %v797 = vunpack.c.h.b16 %v695
        %v798 = vpack.c.b16 %v736, %v734
        %v799 = vpack.c.b16 %v737, %v735
        %v800 = vpack.c.b16 %v740, %v738
        %v801 = vpack.c.b16 %v741, %v739
        %v802 = vpack.c.b16 %v744, %v742
        %v803 = vpack.c.b16 %v745, %v743
        %v804 = vpack.c.b16 %v748, %v746
        %v805 = vpack.c.b16 %v749, %v747
        %v806 = vpack.c.b16 %v752, %v750
        %v807 = vpack.c.b16 %v753, %v751
        %v808 = vpack.c.b16 %v756, %v754
        %v809 = vpack.c.b16 %v757, %v755
        %v810 = vpack.c.b16 %v760, %v758
        %v811 = vpack.c.b16 %v761, %v759
        %v812 = vpack.c.b16 %v764, %v762
        %v813 = vpack.c.b16 %v765, %v763
        %v814 = vpack.c.b16 %v768, %v766
        %v815 = vpack.c.b16 %v769, %v767
        %v816 = vpack.c.b16 %v772, %v770
        %v817 = vpack.c.b16 %v773, %v771
        %v818 = vpack.c.b16 %v776, %v774
        %v819 = vpack.c.b16 %v777, %v775
        %v820 = vpack.c.b16 %v780, %v778
        %v821 = vpack.c.b16 %v781, %v779
        %v822 = vpack.c.b16 %v784, %v782
        %v823 = vpack.c.b16 %v785, %v783
        %v824 = vpack.c.b16 %v788, %v786
        %v825 = vpack.c.b16 %v789, %v787
        %v826 = vpack.c.b16 %v792, %v790
        %v827 = vpack.c.b16 %v793, %v791
        %v828 = vpack.c.b16 %v796, %v794
        %v829 = vpack.c.b16 %v797, %v795
        %862 = vmatpush.bf16.msra.mxu0 %v812
        %863 = vmatpush.bf16.msra.mxu0 %v810
        %864 = vmatpush.bf16.msra.mxu0 %v808
        %865 = vmatpush.bf16.msra.mxu0 %v806
        %866 = vmatpush.bf16.msra.mxu0 %v804
        %867 = vmatpush.bf16.msra.mxu0 %v802
        %868 = vmatpush.bf16.msra.mxu0 %v800
        %869 = vmatpush.bf16.msra.mxu0 %v798
        %870 = vmatmul.bf16.gmra.mxu0 %v648
        %v871 = vpop.f32.mrf.mxu0
        %v872 = vadd.f32 %v698, %v871
        %v873 = vpop.f32.mrf.mxu0
        %v874 = vadd.f32 %v698, %v873
        %875 = vmatmul.bf16.gmra.mxu0 %v650
        %v876 = vpop.f32.mrf.mxu0
        %v877 = vadd.f32 %v698, %v876
        %v878 = vpop.f32.mrf.mxu0
        %v879 = vadd.f32 %v698, %v878
        %880 = vmatmul.bf16.gmra.mxu0 %v652
        %v881 = vpop.f32.mrf.mxu0
        %v882 = vadd.f32 %v698, %v881
        %v883 = vpop.f32.mrf.mxu0
        %v884 = vadd.f32 %v698, %v883
        %885 = vmatmul.bf16.gmra.mxu0 %v654
        %v886 = vpop.f32.mrf.mxu0
        %v887 = vadd.f32 %v698, %v886
        %v888 = vpop.f32.mrf.mxu0
        %v889 = vadd.f32 %v698, %v888
        %890 = vmatmul.bf16.gmra.mxu0 %v656
        %v891 = vpop.f32.mrf.mxu0
        %v892 = vadd.f32 %v698, %v891
        %v893 = vpop.f32.mrf.mxu0
        %v894 = vadd.f32 %v698, %v893
        %895 = vmatmul.bf16.gmra.mxu0 %v658
        %v896 = vpop.f32.mrf.mxu0
        %v897 = vadd.f32 %v698, %v896
        %v898 = vpop.f32.mrf.mxu0
        %v899 = vadd.f32 %v698, %v898
        %900 = vmatmul.bf16.gmra.mxu0 %v660
        %v901 = vpop.f32.mrf.mxu0
        %v902 = vadd.f32 %v698, %v901
        %v903 = vpop.f32.mrf.mxu0
        %v904 = vadd.f32 %v698, %v903
        %905 = vmatmul.bf16.gmra.mxu0 %v662
        %v906 = vpop.f32.mrf.mxu0
        %v907 = vadd.f32 %v698, %v906
        %v908 = vpop.f32.mrf.mxu0
        %v909 = vadd.f32 %v698, %v908
        %910 = vdwg.mxu0
        %911 = vmatpush.bf16.msra.mxu0 %v828
        %912 = vmatpush.bf16.msra.mxu0 %v826
        %913 = vmatpush.bf16.msra.mxu0 %v824
        %914 = vmatpush.bf16.msra.mxu0 %v822
        %915 = vmatpush.bf16.msra.mxu0 %v820
        %916 = vmatpush.bf16.msra.mxu0 %v818
        %917 = vmatpush.bf16.msra.mxu0 %v816
        %918 = vmatpush.bf16.msra.mxu0 %v814
        %919 = vmatmul.bf16.gmra.mxu0 %v649
        %v920 = vpop.f32.mrf.mxu0
        %v921 = vadd.f32 %v872, %v920
        %v922 = vpop.f32.mrf.mxu0
        %v923 = vadd.f32 %v874, %v922
        %924 = vmatmul.bf16.gmra.mxu0 %v651
        %v925 = vpop.f32.mrf.mxu0
        %v926 = vadd.f32 %v877, %v925
        %v927 = vpop.f32.mrf.mxu0
        %v928 = vadd.f32 %v879, %v927
        %929 = vmatmul.bf16.gmra.mxu0 %v653
        %v930 = vpop.f32.mrf.mxu0
        %v931 = vadd.f32 %v882, %v930
        %v932 = vpop.f32.mrf.mxu0
        %v933 = vadd.f32 %v884, %v932
        %934 = vmatmul.bf16.gmra.mxu0 %v655
        %v935 = vpop.f32.mrf.mxu0
        %v936 = vadd.f32 %v887, %v935
        %v937 = vpop.f32.mrf.mxu0
        %v938 = vadd.f32 %v889, %v937
        %939 = vmatmul.bf16.gmra.mxu0 %v657
        %v940 = vpop.f32.mrf.mxu0
        %v941 = vadd.f32 %v892, %v940
        %v942 = vpop.f32.mrf.mxu0
        %v943 = vadd.f32 %v894, %v942
        %944 = vmatmul.bf16.gmra.mxu0 %v659
        %v945 = vpop.f32.mrf.mxu0
        %v946 = vadd.f32 %v897, %v945
        %v947 = vpop.f32.mrf.mxu0
        %v948 = vadd.f32 %v899, %v947
        %949 = vmatmul.bf16.gmra.mxu0 %v661
        %v950 = vpop.f32.mrf.mxu0
        %v951 = vadd.f32 %v902, %v950
        %v952 = vpop.f32.mrf.mxu0
        %v953 = vadd.f32 %v904, %v952
        %954 = vmatmul.bf16.gmra.mxu0 %v663
        %v955 = vpop.f32.mrf.mxu0
        %v956 = vadd.f32 %v907, %v955
        %v957 = vpop.f32.mrf.mxu0
        %v958 = vadd.f32 %v909, %v957
        %959 = vdwg.mxu0
        %960 = vmatpush.bf16.msra.mxu0 %v813
        %961 = vmatpush.bf16.msra.mxu0 %v811
        %962 = vmatpush.bf16.msra.mxu0 %v809
        %963 = vmatpush.bf16.msra.mxu0 %v807
        %964 = vmatpush.bf16.msra.mxu0 %v805
        %965 = vmatpush.bf16.msra.mxu0 %v803
        %966 = vmatpush.bf16.msra.mxu0 %v801
        %967 = vmatpush.bf16.msra.mxu0 %v799
        %968 = vmatmul.bf16.gmra.mxu0 %v648
        %v969 = vpop.f32.mrf.mxu0
        %v970 = vadd.f32 %v699, %v969
        %v971 = vpop.f32.mrf.mxu0
        %v972 = vadd.f32 %v699, %v971
        %973 = vmatmul.bf16.gmra.mxu0 %v650
        %v974 = vpop.f32.mrf.mxu0
        %v975 = vadd.f32 %v699, %v974
        %v976 = vpop.f32.mrf.mxu0
        %v977 = vadd.f32 %v699, %v976
        %978 = vmatmul.bf16.gmra.mxu0 %v652
        %v979 = vpop.f32.mrf.mxu0
        %v980 = vadd.f32 %v699, %v979
        %v981 = vpop.f32.mrf.mxu0
        %v982 = vadd.f32 %v699, %v981
        %983 = vmatmul.bf16.gmra.mxu0 %v654
        %v984 = vpop.f32.mrf.mxu0
        %v985 = vadd.f32 %v699, %v984
        %v986 = vpop.f32.mrf.mxu0
        %v987 = vadd.f32 %v699, %v986
        %988 = vmatmul.bf16.gmra.mxu0 %v656
        %v989 = vpop.f32.mrf.mxu0
        %v990 = vadd.f32 %v699, %v989
        %v991 = vpop.f32.mrf.mxu0
        %v992 = vadd.f32 %v699, %v991
        %993 = vmatmul.bf16.gmra.mxu0 %v658
        %v994 = vpop.f32.mrf.mxu0
        %v995 = vadd.f32 %v699, %v994
        %v996 = vpop.f32.mrf.mxu0
        %v997 = vadd.f32 %v699, %v996
        %998 = vmatmul.bf16.gmra.mxu0 %v660
        %v999 = vpop.f32.mrf.mxu0
        %v1000 = vadd.f32 %v699, %v999
        %v1001 = vpop.f32.mrf.mxu0
        %v1002 = vadd.f32 %v699, %v1001
        %1003 = vmatmul.bf16.gmra.mxu0 %v662
        %v1004 = vpop.f32.mrf.mxu0
        %v1005 = vadd.f32 %v699, %v1004
        %v1006 = vpop.f32.mrf.mxu0
        %v1007 = vadd.f32 %v699, %v1006
        %1008 = vdwg.mxu0
        %1009 = vmatpush.bf16.msra.mxu0 %v829
        %1010 = vmatpush.bf16.msra.mxu0 %v827
        %1011 = vmatpush.bf16.msra.mxu0 %v825
        %1012 = vmatpush.bf16.msra.mxu0 %v823
        %1013 = vmatpush.bf16.msra.mxu0 %v821
        %1014 = vmatpush.bf16.msra.mxu0 %v819
        %1015 = vmatpush.bf16.msra.mxu0 %v817
        %1016 = vmatpush.bf16.msra.mxu0 %v815
        %1017 = vmatmul.bf16.gmra.mxu0 %v649
        %v1018 = vpop.f32.mrf.mxu0
        %v1019 = vadd.f32 %v970, %v1018
        %v1020 = vpop.f32.mrf.mxu0
        %v1021 = vadd.f32 %v972, %v1020
        %1022 = vmatmul.bf16.gmra.mxu0 %v651
        %v1023 = vpop.f32.mrf.mxu0
        %v1024 = vadd.f32 %v975, %v1023
        %v1025 = vpop.f32.mrf.mxu0
        %v1026 = vadd.f32 %v977, %v1025
        %1027 = vmatmul.bf16.gmra.mxu0 %v653
        %v1028 = vpop.f32.mrf.mxu0
        %v1029 = vadd.f32 %v980, %v1028
        %v1030 = vpop.f32.mrf.mxu0
        %v1031 = vadd.f32 %v982, %v1030
        %1032 = vmatmul.bf16.gmra.mxu0 %v655
        %v1033 = vpop.f32.mrf.mxu0
        %v1034 = vadd.f32 %v985, %v1033
        %v1035 = vpop.f32.mrf.mxu0
        %v1036 = vadd.f32 %v987, %v1035
        %1037 = vmatmul.bf16.gmra.mxu0 %v657
        %v1038 = vpop.f32.mrf.mxu0
        %v1039 = vadd.f32 %v990, %v1038
        %v1040 = vpop.f32.mrf.mxu0
        %v1041 = vadd.f32 %v992, %v1040
        %1042 = vmatmul.bf16.gmra.mxu0 %v659
        %v1043 = vpop.f32.mrf.mxu0
        %v1044 = vadd.f32 %v995, %v1043
        %v1045 = vpop.f32.mrf.mxu0
        %v1046 = vadd.f32 %v997, %v1045
        %1047 = vmatmul.bf16.gmra.mxu0 %v661
        %v1048 = vpop.f32.mrf.mxu0
        %v1049 = vadd.f32 %v1000, %v1048
        %v1050 = vpop.f32.mrf.mxu0
        %v1051 = vadd.f32 %v1002, %v1050
        %1052 = vmatmul.bf16.gmra.mxu0 %v663
        %v1053 = vpop.f32.mrf.mxu0
        %v1054 = vadd.f32 %v1005, %v1053
        %v1055 = vpop.f32.mrf.mxu0
        %v1056 = vadd.f32 %v1007, %v1055
        %1057 = vdwg.mxu0
        %v1058 = vmax.f32 %v921, 0.0
        %v1059 = vmax.f32 %v1019, 0.0
        %v1060 = vmax.f32 %v923, 0.0
        %v1061 = vmax.f32 %v1021, 0.0
        %v1062 = vmax.f32 %v926, 0.0
        %v1063 = vmax.f32 %v1024, 0.0
        %v1064 = vmax.f32 %v928, 0.0
        %v1065 = vmax.f32 %v1026, 0.0
        %v1066 = vmax.f32 %v931, 0.0
        %v1067 = vmax.f32 %v1029, 0.0
        %v1068 = vmax.f32 %v933, 0.0
        %v1069 = vmax.f32 %v1031, 0.0
        %v1070 = vmax.f32 %v936, 0.0
        %v1071 = vmax.f32 %v1034, 0.0
        %v1072 = vmax.f32 %v938, 0.0
        %v1073 = vmax.f32 %v1036, 0.0
        %v1074 = vmax.f32 %v941, 0.0
        %v1075 = vmax.f32 %v1039, 0.0
        %v1076 = vmax.f32 %v943, 0.0
        %v1077 = vmax.f32 %v1041, 0.0
        %v1078 = vmax.f32 %v946, 0.0
        %v1079 = vmax.f32 %v1044, 0.0
        %v1080 = vmax.f32 %v948, 0.0
        %v1081 = vmax.f32 %v1046, 0.0
        %v1082 = vmax.f32 %v951, 0.0
        %v1083 = vmax.f32 %v1049, 0.0
        %v1084 = vmax.f32 %v953, 0.0
        %v1085 = vmax.f32 %v1051, 0.0
        %v1086 = vmax.f32 %v956, 0.0
        %v1087 = vmax.f32 %v1054, 0.0
        %v1088 = vmax.f32 %v958, 0.0
        %v1089 = vmax.f32 %v1056, 0.0
        %v1090 = vpack.c.bf16 %v1060, %v1058
        %v1091 = vpack.c.bf16 %v1061, %v1059
        %v1092 = vpack.c.bf16 %v1064, %v1062
        %v1093 = vpack.c.bf16 %v1065, %v1063
        %v1094 = vpack.c.bf16 %v1068, %v1066
        %v1095 = vpack.c.bf16 %v1069, %v1067
        %v1096 = vpack.c.bf16 %v1072, %v1070
        %v1097 = vpack.c.bf16 %v1073, %v1071
        %v1098 = vpack.c.bf16 %v1076, %v1074
        %v1099 = vpack.c.bf16 %v1077, %v1075
        %v1100 = vpack.c.bf16 %v1080, %v1078
        %v1101 = vpack.c.bf16 %v1081, %v1079
        %v1102 = vpack.c.bf16 %v1084, %v1082
        %v1103 = vpack.c.bf16 %v1085, %v1083
        %v1104 = vpack.c.bf16 %v1088, %v1086
        %v1105 = vpack.c.bf16 %v1089, %v1087
        %v1106 = vld [vmem:[#allocation5] sm:$0xff]
        %v1107 = vld [vmem:[#allocation5 + $0x8] sm:$0xff]
        %v1108 = vld [vmem:[#allocation5 + $0x10] sm:$0xff]
        %v1109 = vld [vmem:[#allocation5 + $0x18] sm:$0xff]
        %v1110 = vld [vmem:[#allocation5 + $0x20] sm:$0xff]
        %v1111 = vld [vmem:[#allocation5 + $0x28] sm:$0xff]
        %v1112 = vld [vmem:[#allocation5 + $0x30] sm:$0xff]
        %v1113 = vld [vmem:[#allocation5 + $0x38] sm:$0xff]
        %v1114 = vld [vmem:[#allocation5 + $0x40] sm:$0xff]
        %v1115 = vld [vmem:[#allocation5 + $0x48] sm:$0xff]
        %v1116 = vld [vmem:[#allocation5 + $0x50] sm:$0xff]
        %v1117 = vld [vmem:[#allocation5 + $0x58] sm:$0xff]
        %v1118 = vld [vmem:[#allocation5 + $0x60] sm:$0xff]
        %v1119 = vld [vmem:[#allocation5 + $0x68] sm:$0xff]
        %v1120 = vld [vmem:[#allocation5 + $0x70] sm:$0xff]
        %v1121 = vld [vmem:[#allocation5 + $0x78] sm:$0xff]
        %v1122 = vld [vmem:[#allocation5 + $0x80] sm:$0xff]
        %v1123 = vld [vmem:[#allocation5 + $0x88] sm:$0xff]
        %v1124 = vld [vmem:[#allocation5 + $0x90] sm:$0xff]
        %v1125 = vld [vmem:[#allocation5 + $0x98] sm:$0xff]
        %v1126 = vld [vmem:[#allocation5 + $0xa0] sm:$0xff]
        %v1127 = vld [vmem:[#allocation5 + $0xa8] sm:$0xff]
        %v1128 = vld [vmem:[#allocation5 + $0xb0] sm:$0xff]
        %v1129 = vld [vmem:[#allocation5 + $0xb8] sm:$0xff]
        %v1130 = vld [vmem:[#allocation5 + $0xc0] sm:$0xff]
        %v1131 = vld [vmem:[#allocation5 + $0xc8] sm:$0xff]
        %v1132 = vld [vmem:[#allocation5 + $0xd0] sm:$0xff]
        %v1133 = vld [vmem:[#allocation5 + $0xd8] sm:$0xff]
        %v1134 = vld [vmem:[#allocation5 + $0xe0] sm:$0xff]
        %v1135 = vld [vmem:[#allocation5 + $0xe8] sm:$0xff]
        %v1136 = vld [vmem:[#allocation5 + $0xf0] sm:$0xff]
        %v1137 = vld [vmem:[#allocation5 + $0xf8] sm:$0xff]
        %v1138 = vld [vmem:[%s6] sm:$0x3]
        %v1140 = vperm.slane %v1138, 0
        %v1141 = vperm.slane %v1138, 1
        %v1176 = vunpack.c.l.b16 %v1106
        %v1177 = vunpack.c.h.b16 %v1106
        %v1178 = vunpack.c.l.b16 %v1107
        %v1179 = vunpack.c.h.b16 %v1107
        %v1180 = vunpack.c.l.b16 %v1108
        %v1181 = vunpack.c.h.b16 %v1108
        %v1182 = vunpack.c.l.b16 %v1109
        %v1183 = vunpack.c.h.b16 %v1109
        %v1184 = vunpack.c.l.b16 %v1110
        %v1185 = vunpack.c.h.b16 %v1110
        %v1186 = vunpack.c.l.b16 %v1111
        %v1187 = vunpack.c.h.b16 %v1111
        %v1188 = vunpack.c.l.b16 %v1112
        %v1189 = vunpack.c.h.b16 %v1112
        %v1190 = vunpack.c.l.b16 %v1113
        %v1191 = vunpack.c.h.b16 %v1113
        %v1192 = vunpack.c.l.b16 %v1114
        %v1193 = vunpack.c.h.b16 %v1114
        %v1194 = vunpack.c.l.b16 %v1115
        %v1195 = vunpack.c.h.b16 %v1115
        %v1196 = vunpack.c.l.b16 %v1116
        %v1197 = vunpack.c.h.b16 %v1116
        %v1198 = vunpack.c.l.b16 %v1117
        %v1199 = vunpack.c.h.b16 %v1117
        %v1200 = vunpack.c.l.b16 %v1118
        %v1201 = vunpack.c.h.b16 %v1118
        %v1202 = vunpack.c.l.b16 %v1119
        %v1203 = vunpack.c.h.b16 %v1119
        %v1204 = vunpack.c.l.b16 %v1120
        %v1205 = vunpack.c.h.b16 %v1120
        %v1206 = vunpack.c.l.b16 %v1121
        %v1207 = vunpack.c.h.b16 %v1121
        %v1208 = vunpack.c.l.b16 %v1122
        %v1209 = vunpack.c.h.b16 %v1122
        %v1210 = vunpack.c.l.b16 %v1123
        %v1211 = vunpack.c.h.b16 %v1123
        %v1212 = vunpack.c.l.b16 %v1124
        %v1213 = vunpack.c.h.b16 %v1124
        %v1214 = vunpack.c.l.b16 %v1125
        %v1215 = vunpack.c.h.b16 %v1125
        %v1216 = vunpack.c.l.b16 %v1126
        %v1217 = vunpack.c.h.b16 %v1126
        %v1218 = vunpack.c.l.b16 %v1127
        %v1219 = vunpack.c.h.b16 %v1127
        %v1220 = vunpack.c.l.b16 %v1128
        %v1221 = vunpack.c.h.b16 %v1128
        %v1222 = vunpack.c.l.b16 %v1129
        %v1223 = vunpack.c.h.b16 %v1129
        %v1224 = vunpack.c.l.b16 %v1130
        %v1225 = vunpack.c.h.b16 %v1130
        %v1226 = vunpack.c.l.b16 %v1131
        %v1227 = vunpack.c.h.b16 %v1131
        %v1228 = vunpack.c.l.b16 %v1132
        %v1229 = vunpack.c.h.b16 %v1132
        %v1230 = vunpack.c.l.b16 %v1133
        %v1231 = vunpack.c.h.b16 %v1133
        %v1232 = vunpack.c.l.b16 %v1134
        %v1233 = vunpack.c.h.b16 %v1134
        %v1234 = vunpack.c.l.b16 %v1135
        %v1235 = vunpack.c.h.b16 %v1135
        %v1236 = vunpack.c.l.b16 %v1136
        %v1237 = vunpack.c.h.b16 %v1136
        %v1238 = vunpack.c.l.b16 %v1137
        %v1239 = vunpack.c.h.b16 %v1137
        %v1240 = vpack.c.b16 %v1178, %v1176
        %v1241 = vpack.c.b16 %v1179, %v1177
        %v1242 = vpack.c.b16 %v1182, %v1180
        %v1243 = vpack.c.b16 %v1183, %v1181
        %v1244 = vpack.c.b16 %v1186, %v1184
        %v1245 = vpack.c.b16 %v1187, %v1185
        %v1246 = vpack.c.b16 %v1190, %v1188
        %v1247 = vpack.c.b16 %v1191, %v1189
        %v1248 = vpack.c.b16 %v1194, %v1192
        %v1249 = vpack.c.b16 %v1195, %v1193
        %v1250 = vpack.c.b16 %v1198, %v1196
        %v1251 = vpack.c.b16 %v1199, %v1197
        %v1252 = vpack.c.b16 %v1202, %v1200
        %v1253 = vpack.c.b16 %v1203, %v1201
        %v1254 = vpack.c.b16 %v1206, %v1204
        %v1255 = vpack.c.b16 %v1207, %v1205
        %v1256 = vpack.c.b16 %v1210, %v1208
        %v1257 = vpack.c.b16 %v1211, %v1209
        %v1258 = vpack.c.b16 %v1214, %v1212
        %v1259 = vpack.c.b16 %v1215, %v1213
        %v1260 = vpack.c.b16 %v1218, %v1216
        %v1261 = vpack.c.b16 %v1219, %v1217
        %v1262 = vpack.c.b16 %v1222, %v1220
        %v1263 = vpack.c.b16 %v1223, %v1221
        %v1264 = vpack.c.b16 %v1226, %v1224
        %v1265 = vpack.c.b16 %v1227, %v1225
        %v1266 = vpack.c.b16 %v1230, %v1228
        %v1267 = vpack.c.b16 %v1231, %v1229
        %v1268 = vpack.c.b16 %v1234, %v1232
        %v1269 = vpack.c.b16 %v1235, %v1233
        %v1270 = vpack.c.b16 %v1238, %v1236
        %v1271 = vpack.c.b16 %v1239, %v1237
        %1304 = vmatpush.bf16.msra.mxu0 %v1254
        %1305 = vmatpush.bf16.msra.mxu0 %v1252
        %1306 = vmatpush.bf16.msra.mxu0 %v1250
        %1307 = vmatpush.bf16.msra.mxu0 %v1248
        %1308 = vmatpush.bf16.msra.mxu0 %v1246
        %1309 = vmatpush.bf16.msra.mxu0 %v1244
        %1310 = vmatpush.bf16.msra.mxu0 %v1242
        %1311 = vmatpush.bf16.msra.mxu0 %v1240
        %1312 = vmatmul.bf16.gmra.mxu0 %v1090
        %v1313 = vpop.f32.mrf.mxu0
        %v1314 = vadd.f32 %v1140, %v1313
        %v1315 = vpop.f32.mrf.mxu0
        %v1316 = vadd.f32 %v1140, %v1315
        %1317 = vmatmul.bf16.gmra.mxu0 %v1092
        %v1318 = vpop.f32.mrf.mxu0
        %v1319 = vadd.f32 %v1140, %v1318
        %v1320 = vpop.f32.mrf.mxu0
        %v1321 = vadd.f32 %v1140, %v1320
        %1322 = vmatmul.bf16.gmra.mxu0 %v1094
        %v1323 = vpop.f32.mrf.mxu0
        %v1324 = vadd.f32 %v1140, %v1323
        %v1325 = vpop.f32.mrf.mxu0
        %v1326 = vadd.f32 %v1140, %v1325
        %1327 = vmatmul.bf16.gmra.mxu0 %v1096
        %v1328 = vpop.f32.mrf.mxu0
        %v1329 = vadd.f32 %v1140, %v1328
        %v1330 = vpop.f32.mrf.mxu0
        %v1331 = vadd.f32 %v1140, %v1330
        %1332 = vmatmul.bf16.gmra.mxu0 %v1098
        %v1333 = vpop.f32.mrf.mxu0
        %v1334 = vadd.f32 %v1140, %v1333
        %v1335 = vpop.f32.mrf.mxu0
        %v1336 = vadd.f32 %v1140, %v1335
        %1337 = vmatmul.bf16.gmra.mxu0 %v1100
        %v1338 = vpop.f32.mrf.mxu0
        %v1339 = vadd.f32 %v1140, %v1338
        %v1340 = vpop.f32.mrf.mxu0
        %v1341 = vadd.f32 %v1140, %v1340
        %1342 = vmatmul.bf16.gmra.mxu0 %v1102
        %v1343 = vpop.f32.mrf.mxu0
        %v1344 = vadd.f32 %v1140, %v1343
        %v1345 = vpop.f32.mrf.mxu0
        %v1346 = vadd.f32 %v1140, %v1345
        %1347 = vmatmul.bf16.gmra.mxu0 %v1104
        %v1348 = vpop.f32.mrf.mxu0
        %v1349 = vadd.f32 %v1140, %v1348
        %v1350 = vpop.f32.mrf.mxu0
        %v1351 = vadd.f32 %v1140, %v1350
        %1352 = vdwg.mxu0
        %1353 = vmatpush.bf16.msra.mxu0 %v1270
        %1354 = vmatpush.bf16.msra.mxu0 %v1268
        %1355 = vmatpush.bf16.msra.mxu0 %v1266
        %1356 = vmatpush.bf16.msra.mxu0 %v1264
        %1357 = vmatpush.bf16.msra.mxu0 %v1262
        %1358 = vmatpush.bf16.msra.mxu0 %v1260
        %1359 = vmatpush.bf16.msra.mxu0 %v1258
        %1360 = vmatpush.bf16.msra.mxu0 %v1256
        %1361 = vmatmul.bf16.gmra.mxu0 %v1091
        %v1362 = vpop.f32.mrf.mxu0
        %v1363 = vadd.f32 %v1314, %v1362
        %v1364 = vpop.f32.mrf.mxu0
        %v1365 = vadd.f32 %v1316, %v1364
        %1366 = vmatmul.bf16.gmra.mxu0 %v1093
        %v1367 = vpop.f32.mrf.mxu0
        %v1368 = vadd.f32 %v1319, %v1367
        %v1369 = vpop.f32.mrf.mxu0
        %v1370 = vadd.f32 %v1321, %v1369
        %1371 = vmatmul.bf16.gmra.mxu0 %v1095
        %v1372 = vpop.f32.mrf.mxu0
        %v1373 = vadd.f32 %v1324, %v1372
        %v1374 = vpop.f32.mrf.mxu0
        %v1375 = vadd.f32 %v1326, %v1374
        %1376 = vmatmul.bf16.gmra.mxu0 %v1097
        %v1377 = vpop.f32.mrf.mxu0
        %v1378 = vadd.f32 %v1329, %v1377
        %v1379 = vpop.f32.mrf.mxu0
        %v1380 = vadd.f32 %v1331, %v1379
        %1381 = vmatmul.bf16.gmra.mxu0 %v1099
        %v1382 = vpop.f32.mrf.mxu0
        %v1383 = vadd.f32 %v1334, %v1382
        %v1384 = vpop.f32.mrf.mxu0
        %v1385 = vadd.f32 %v1336, %v1384
        %1386 = vmatmul.bf16.gmra.mxu0 %v1101
        %v1387 = vpop.f32.mrf.mxu0
        %v1388 = vadd.f32 %v1339, %v1387
        %v1389 = vpop.f32.mrf.mxu0
        %v1390 = vadd.f32 %v1341, %v1389
        %1391 = vmatmul.bf16.gmra.mxu0 %v1103
        %v1392 = vpop.f32.mrf.mxu0
        %v1393 = vadd.f32 %v1344, %v1392
        %v1394 = vpop.f32.mrf.mxu0
        %v1395 = vadd.f32 %v1346, %v1394
        %1396 = vmatmul.bf16.gmra.mxu0 %v1105
        %v1397 = vpop.f32.mrf.mxu0
        %v1398 = vadd.f32 %v1349, %v1397
        %v1399 = vpop.f32.mrf.mxu0
        %v1400 = vadd.f32 %v1351, %v1399
        %1401 = vdwg.mxu0
        %1402 = vmatpush.bf16.msra.mxu0 %v1255
        %1403 = vmatpush.bf16.msra.mxu0 %v1253
        %1404 = vmatpush.bf16.msra.mxu0 %v1251
        %1405 = vmatpush.bf16.msra.mxu0 %v1249
        %1406 = vmatpush.bf16.msra.mxu0 %v1247
        %1407 = vmatpush.bf16.msra.mxu0 %v1245
        %1408 = vmatpush.bf16.msra.mxu0 %v1243
        %1409 = vmatpush.bf16.msra.mxu0 %v1241
        %1410 = vmatmul.bf16.gmra.mxu0 %v1090
        %v1411 = vpop.f32.mrf.mxu0
        %v1412 = vadd.f32 %v1141, %v1411
        %v1413 = vpop.f32.mrf.mxu0
        %v1414 = vadd.f32 %v1141, %v1413
        %1415 = vmatmul.bf16.gmra.mxu0 %v1092
        %v1416 = vpop.f32.mrf.mxu0
        %v1417 = vadd.f32 %v1141, %v1416
        %v1418 = vpop.f32.mrf.mxu0
        %v1419 = vadd.f32 %v1141, %v1418
        %1420 = vmatmul.bf16.gmra.mxu0 %v1094
        %v1421 = vpop.f32.mrf.mxu0
        %v1422 = vadd.f32 %v1141, %v1421
        %v1423 = vpop.f32.mrf.mxu0
        %v1424 = vadd.f32 %v1141, %v1423
        %1425 = vmatmul.bf16.gmra.mxu0 %v1096
        %v1426 = vpop.f32.mrf.mxu0
        %v1427 = vadd.f32 %v1141, %v1426
        %v1428 = vpop.f32.mrf.mxu0
        %v1429 = vadd.f32 %v1141, %v1428
        %1430 = vmatmul.bf16.gmra.mxu0 %v1098
        %v1431 = vpop.f32.mrf.mxu0
        %v1432 = vadd.f32 %v1141, %v1431
        %v1433 = vpop.f32.mrf.mxu0
        %v1434 = vadd.f32 %v1141, %v1433
        %1435 = vmatmul.bf16.gmra.mxu0 %v1100
        %v1436 = vpop.f32.mrf.mxu0
        %v1437 = vadd.f32 %v1141, %v1436
        %v1438 = vpop.f32.mrf.mxu0
        %v1439 = vadd.f32 %v1141, %v1438
        %1440 = vmatmul.bf16.gmra.mxu0 %v1102
        %v1441 = vpop.f32.mrf.mxu0
        %v1442 = vadd.f32 %v1141, %v1441
        %v1443 = vpop.f32.mrf.mxu0
        %v1444 = vadd.f32 %v1141, %v1443
        %1445 = vmatmul.bf16.gmra.mxu0 %v1104
        %v1446 = vpop.f32.mrf.mxu0
        %v1447 = vadd.f32 %v1141, %v1446
        %v1448 = vpop.f32.mrf.mxu0
        %v1449 = vadd.f32 %v1141, %v1448
        %1450 = vdwg.mxu0
        %1451 = vmatpush.bf16.msra.mxu0 %v1271
        %1452 = vmatpush.bf16.msra.mxu0 %v1269
        %1453 = vmatpush.bf16.msra.mxu0 %v1267
        %1454 = vmatpush.bf16.msra.mxu0 %v1265
        %1455 = vmatpush.bf16.msra.mxu0 %v1263
        %1456 = vmatpush.bf16.msra.mxu0 %v1261
        %1457 = vmatpush.bf16.msra.mxu0 %v1259
        %1458 = vmatpush.bf16.msra.mxu0 %v1257
        %1459 = vmatmul.bf16.gmra.mxu0 %v1091
        %v1460 = vpop.f32.mrf.mxu0
        %v1461 = vadd.f32 %v1412, %v1460
        %v1462 = vpop.f32.mrf.mxu0
        %v1463 = vadd.f32 %v1414, %v1462
        %1464 = vmatmul.bf16.gmra.mxu0 %v1093
        %v1465 = vpop.f32.mrf.mxu0
        %v1466 = vadd.f32 %v1417, %v1465
        %v1467 = vpop.f32.mrf.mxu0
        %v1468 = vadd.f32 %v1419, %v1467
        %1469 = vmatmul.bf16.gmra.mxu0 %v1095
        %v1470 = vpop.f32.mrf.mxu0
        %v1471 = vadd.f32 %v1422, %v1470
        %v1472 = vpop.f32.mrf.mxu0
        %v1473 = vadd.f32 %v1424, %v1472
        %1474 = vmatmul.bf16.gmra.mxu0 %v1097
        %v1475 = vpop.f32.mrf.mxu0
        %v1476 = vadd.f32 %v1427, %v1475
        %v1477 = vpop.f32.mrf.mxu0
        %v1478 = vadd.f32 %v1429, %v1477
        %1479 = vmatmul.bf16.gmra.mxu0 %v1099
        %v1480 = vpop.f32.mrf.mxu0
        %v1481 = vadd.f32 %v1432, %v1480
        %v1482 = vpop.f32.mrf.mxu0
        %v1483 = vadd.f32 %v1434, %v1482
        %1484 = vmatmul.bf16.gmra.mxu0 %v1101
        %v1485 = vpop.f32.mrf.mxu0
        %v1486 = vadd.f32 %v1437, %v1485
        %v1487 = vpop.f32.mrf.mxu0
        %v1488 = vadd.f32 %v1439, %v1487
        %1489 = vmatmul.bf16.gmra.mxu0 %v1103
        %v1490 = vpop.f32.mrf.mxu0
        %v1491 = vadd.f32 %v1442, %v1490
        %v1492 = vpop.f32.mrf.mxu0
        %v1493 = vadd.f32 %v1444, %v1492
        %1494 = vmatmul.bf16.gmra.mxu0 %v1105
        %v1495 = vpop.f32.mrf.mxu0
        %v1496 = vadd.f32 %v1447, %v1495
        %v1497 = vpop.f32.mrf.mxu0
        %v1498 = vadd.f32 %v1449, %v1497
        %1499 = vdwg.mxu0
        %v1500 = vmax.f32 %v1363, 0.0
        %v1501 = vmax.f32 %v1461, 0.0
        %v1502 = vmax.f32 %v1365, 0.0
        %v1503 = vmax.f32 %v1463, 0.0
        %v1504 = vmax.f32 %v1368, 0.0
        %v1505 = vmax.f32 %v1466, 0.0
        %v1506 = vmax.f32 %v1370, 0.0
        %v1507 = vmax.f32 %v1468, 0.0
        %v1508 = vmax.f32 %v1373, 0.0
        %v1509 = vmax.f32 %v1471, 0.0
        %v1510 = vmax.f32 %v1375, 0.0
        %v1511 = vmax.f32 %v1473, 0.0
        %v1512 = vmax.f32 %v1378, 0.0
        %v1513 = vmax.f32 %v1476, 0.0
        %v1514 = vmax.f32 %v1380, 0.0
        %v1515 = vmax.f32 %v1478, 0.0
        %v1516 = vmax.f32 %v1383, 0.0
        %v1517 = vmax.f32 %v1481, 0.0
        %v1518 = vmax.f32 %v1385, 0.0
        %v1519 = vmax.f32 %v1483, 0.0
        %v1520 = vmax.f32 %v1388, 0.0
        %v1521 = vmax.f32 %v1486, 0.0
        %v1522 = vmax.f32 %v1390, 0.0
        %v1523 = vmax.f32 %v1488, 0.0
        %v1524 = vmax.f32 %v1393, 0.0
        %v1525 = vmax.f32 %v1491, 0.0
        %v1526 = vmax.f32 %v1395, 0.0
        %v1527 = vmax.f32 %v1493, 0.0
        %v1528 = vmax.f32 %v1398, 0.0
        %v1529 = vmax.f32 %v1496, 0.0
        %v1530 = vmax.f32 %v1400, 0.0
        %v1531 = vmax.f32 %v1498, 0.0
        %v1532 = vpack.c.bf16 %v1502, %v1500
        %v1533 = vpack.c.bf16 %v1503, %v1501
        %v1534 = vpack.c.bf16 %v1506, %v1504
        %v1535 = vpack.c.bf16 %v1507, %v1505
        %v1536 = vpack.c.bf16 %v1510, %v1508
        %v1537 = vpack.c.bf16 %v1511, %v1509
        %v1538 = vpack.c.bf16 %v1514, %v1512
        %v1539 = vpack.c.bf16 %v1515, %v1513
        %v1540 = vpack.c.bf16 %v1518, %v1516
        %v1541 = vpack.c.bf16 %v1519, %v1517
        %v1542 = vpack.c.bf16 %v1522, %v1520
        %v1543 = vpack.c.bf16 %v1523, %v1521
        %v1544 = vpack.c.bf16 %v1526, %v1524
        %v1545 = vpack.c.bf16 %v1527, %v1525
        %v1546 = vpack.c.bf16 %v1530, %v1528
        %v1547 = vpack.c.bf16 %v1531, %v1529
        %v1548 = vld [vmem:[%s7] sm:$0xf]
        %v1549 = vld [vmem:[%s7 + $0x4] sm:$0xf]
        %v1550 = vld [vmem:[%s7 + $0x8] sm:$0xf]
        %v1551 = vld [vmem:[%s7 + $0xc] sm:$0xf]
        %v1552 = vld [vmem:[%s7 + $0x10] sm:$0xf]
        %v1553 = vld [vmem:[%s7 + $0x14] sm:$0xf]
        %v1554 = vld [vmem:[%s7 + $0x18] sm:$0xf]
        %v1555 = vld [vmem:[%s7 + $0x1c] sm:$0xf]
        %v1556 = vld [vmem:[%s7 + $0x20] sm:$0xf]
        %v1557 = vld [vmem:[%s7 + $0x24] sm:$0xf]
        %v1558 = vld [vmem:[%s7 + $0x28] sm:$0xf]
        %v1559 = vld [vmem:[%s7 + $0x2c] sm:$0xf]
        %v1560 = vld [vmem:[%s7 + $0x30] sm:$0xf]
        %v1561 = vld [vmem:[%s7 + $0x34] sm:$0xf]
        %v1562 = vld [vmem:[%s7 + $0x38] sm:$0xf]
        %v1563 = vld [vmem:[%s7 + $0x3c] sm:$0xf]
        %v1564 = vld [vmem:[%s7 + $0x40] sm:$0xf]
        %v1565 = vld [vmem:[%s7 + $0x44] sm:$0xf]
        %v1566 = vld [vmem:[%s7 + $0x48] sm:$0xf]
        %v1567 = vld [vmem:[%s7 + $0x4c] sm:$0xf]
        %v1568 = vld [vmem:[%s7 + $0x50] sm:$0xf]
        %v1569 = vld [vmem:[%s7 + $0x54] sm:$0xf]
        %v1570 = vld [vmem:[%s7 + $0x58] sm:$0xf]
        %v1571 = vld [vmem:[%s7 + $0x5c] sm:$0xf]
        %v1572 = vld [vmem:[%s7 + $0x60] sm:$0xf]
        %v1573 = vld [vmem:[%s7 + $0x64] sm:$0xf]
        %v1574 = vld [vmem:[%s7 + $0x68] sm:$0xf]
        %v1575 = vld [vmem:[%s7 + $0x6c] sm:$0xf]
        %v1576 = vld [vmem:[%s7 + $0x70] sm:$0xf]
        %v1577 = vld [vmem:[%s7 + $0x74] sm:$0xf]
        %v1578 = vld [vmem:[%s7 + $0x78] sm:$0xf]
        %v1579 = vld [vmem:[%s7 + $0x7c] sm:$0xf]
        %v1580 = vld [vmem:[#allocation7] sm:$0x1]
        %v1582 = vperm.slane %v1580, 0
        %v1616 = vunpack.c.l.b16 %v1548
        %v1617 = vunpack.c.l.b16 %v1549
        %v1618 = vunpack.c.l.b16 %v1550
        %v1619 = vunpack.c.l.b16 %v1551
        %v1620 = vunpack.c.l.b16 %v1552
        %v1621 = vunpack.c.l.b16 %v1553
        %v1622 = vunpack.c.l.b16 %v1554
        %v1623 = vunpack.c.l.b16 %v1555
        %v1624 = vunpack.c.l.b16 %v1556
        %v1625 = vunpack.c.l.b16 %v1557
        %v1626 = vunpack.c.l.b16 %v1558
        %v1627 = vunpack.c.l.b16 %v1559
        %v1628 = vunpack.c.l.b16 %v1560
        %v1629 = vunpack.c.l.b16 %v1561
        %v1630 = vunpack.c.l.b16 %v1562
        %v1631 = vunpack.c.l.b16 %v1563
        %v1632 = vunpack.c.l.b16 %v1564
        %v1633 = vunpack.c.l.b16 %v1565
        %v1634 = vunpack.c.l.b16 %v1566
        %v1635 = vunpack.c.l.b16 %v1567
        %v1636 = vunpack.c.l.b16 %v1568
        %v1637 = vunpack.c.l.b16 %v1569
        %v1638 = vunpack.c.l.b16 %v1570
        %v1639 = vunpack.c.l.b16 %v1571
        %v1640 = vunpack.c.l.b16 %v1572
        %v1641 = vunpack.c.l.b16 %v1573
        %v1642 = vunpack.c.l.b16 %v1574
        %v1643 = vunpack.c.l.b16 %v1575
        %v1644 = vunpack.c.l.b16 %v1576
        %v1645 = vunpack.c.l.b16 %v1577
        %v1646 = vunpack.c.l.b16 %v1578
        %v1647 = vunpack.c.l.b16 %v1579
        %v1648 = vpack.c.b16 %v1617, %v1616
        %v1649 = vpack.c.b16 %v1619, %v1618
        %v1650 = vpack.c.b16 %v1621, %v1620
        %v1651 = vpack.c.b16 %v1623, %v1622
        %v1652 = vpack.c.b16 %v1625, %v1624
        %v1653 = vpack.c.b16 %v1627, %v1626
        %v1654 = vpack.c.b16 %v1629, %v1628
        %v1655 = vpack.c.b16 %v1631, %v1630
        %v1656 = vpack.c.b16 %v1633, %v1632
        %v1657 = vpack.c.b16 %v1635, %v1634
        %v1658 = vpack.c.b16 %v1637, %v1636
        %v1659 = vpack.c.b16 %v1639, %v1638
        %v1660 = vpack.c.b16 %v1641, %v1640
        %v1661 = vpack.c.b16 %v1643, %v1642
        %v1662 = vpack.c.b16 %v1645, %v1644
        %v1663 = vpack.c.b16 %v1647, %v1646
        %1680 = vmatpush.bf16.msra.mxu0 %v1655
        %1681 = vmatpush.bf16.msra.mxu0 %v1654
        %1682 = vmatpush.bf16.msra.mxu0 %v1653
        %1683 = vmatpush.bf16.msra.mxu0 %v1652
        %1684 = vmatpush.bf16.msra.mxu0 %v1651
        %1685 = vmatpush.bf16.msra.mxu0 %v1650
        %1686 = vmatpush.bf16.msra.mxu0 %v1649
        %1687 = vmatpush.bf16.msra.mxu0 %v1648
        %1688 = vmatmul.bf16.gmra.mxu0 %v1532
        %v1689 = vpop.f32.mrf.mxu0
        %v1690 = vadd.f32 %v1582, %v1689
        %v1691 = vpop.f32.mrf.mxu0
        %v1692 = vadd.f32 %v1582, %v1691
        %1693 = vmatmul.bf16.gmra.mxu0 %v1534
        %v1694 = vpop.f32.mrf.mxu0
        %v1695 = vadd.f32 %v1582, %v1694
        %v1696 = vpop.f32.mrf.mxu0
        %v1697 = vadd.f32 %v1582, %v1696
        %1698 = vmatmul.bf16.gmra.mxu0 %v1536
        %v1699 = vpop.f32.mrf.mxu0
        %v1700 = vadd.f32 %v1582, %v1699
        %v1701 = vpop.f32.mrf.mxu0
        %v1702 = vadd.f32 %v1582, %v1701
        %1703 = vmatmul.bf16.gmra.mxu0 %v1538
        %v1704 = vpop.f32.mrf.mxu0
        %v1705 = vadd.f32 %v1582, %v1704
        %v1706 = vpop.f32.mrf.mxu0
        %v1707 = vadd.f32 %v1582, %v1706
        %1708 = vmatmul.bf16.gmra.mxu0 %v1540
        %v1709 = vpop.f32.mrf.mxu0
        %v1710 = vadd.f32 %v1582, %v1709
        %v1711 = vpop.f32.mrf.mxu0
        %v1712 = vadd.f32 %v1582, %v1711
        %1713 = vmatmul.bf16.gmra.mxu0 %v1542
        %v1714 = vpop.f32.mrf.mxu0
        %v1715 = vadd.f32 %v1582, %v1714
        %v1716 = vpop.f32.mrf.mxu0
        %v1717 = vadd.f32 %v1582, %v1716
        %1718 = vmatmul.bf16.gmra.mxu0 %v1544
        %v1719 = vpop.f32.mrf.mxu0
        %v1720 = vadd.f32 %v1582, %v1719
        %v1721 = vpop.f32.mrf.mxu0
        %v1722 = vadd.f32 %v1582, %v1721
        %1723 = vmatmul.bf16.gmra.mxu0 %v1546
        %v1724 = vpop.f32.mrf.mxu0
        %v1725 = vadd.f32 %v1582, %v1724
        %v1726 = vpop.f32.mrf.mxu0
        %v1727 = vadd.f32 %v1582, %v1726
        %1728 = vdwg.mxu0
        %1729 = vmatpush.bf16.msra.mxu0 %v1663
        %1730 = vmatpush.bf16.msra.mxu0 %v1662
        %1731 = vmatpush.bf16.msra.mxu0 %v1661
        %1732 = vmatpush.bf16.msra.mxu0 %v1660
        %1733 = vmatpush.bf16.msra.mxu0 %v1659
        %1734 = vmatpush.bf16.msra.mxu0 %v1658
        %1735 = vmatpush.bf16.msra.mxu0 %v1657
        %1736 = vmatpush.bf16.msra.mxu0 %v1656
        %1737 = vmatmul.bf16.gmra.mxu0 %v1533
        %v1738 = vpop.f32.mrf.mxu0
        %v1739 = vadd.f32 %v1690, %v1738
        %v1740 = vpop.f32.mrf.mxu0
        %v1741 = vadd.f32 %v1692, %v1740
        %1742 = vmatmul.bf16.gmra.mxu0 %v1535
        %v1743 = vpop.f32.mrf.mxu0
        %v1744 = vadd.f32 %v1695, %v1743
        %v1745 = vpop.f32.mrf.mxu0
        %v1746 = vadd.f32 %v1697, %v1745
        %1747 = vmatmul.bf16.gmra.mxu0 %v1537
        %v1748 = vpop.f32.mrf.mxu0
        %v1749 = vadd.f32 %v1700, %v1748
        %v1750 = vpop.f32.mrf.mxu0
        %v1751 = vadd.f32 %v1702, %v1750
        %1752 = vmatmul.bf16.gmra.mxu0 %v1539
        %v1753 = vpop.f32.mrf.mxu0
        %v1754 = vadd.f32 %v1705, %v1753
        %v1755 = vpop.f32.mrf.mxu0
        %v1756 = vadd.f32 %v1707, %v1755
        %1757 = vmatmul.bf16.gmra.mxu0 %v1541
        %v1758 = vpop.f32.mrf.mxu0
        %v1759 = vadd.f32 %v1710, %v1758
        %v1760 = vpop.f32.mrf.mxu0
        %v1761 = vadd.f32 %v1712, %v1760
        %1762 = vmatmul.bf16.gmra.mxu0 %v1543
        %v1763 = vpop.f32.mrf.mxu0
        %v1764 = vadd.f32 %v1715, %v1763
        %v1765 = vpop.f32.mrf.mxu0
        %v1766 = vadd.f32 %v1717, %v1765
        %1767 = vmatmul.bf16.gmra.mxu0 %v1545
        %v1768 = vpop.f32.mrf.mxu0
        %v1769 = vadd.f32 %v1720, %v1768
        %v1770 = vpop.f32.mrf.mxu0
        %v1771 = vadd.f32 %v1722, %v1770
        %1772 = vmatmul.bf16.gmra.mxu0 %v1547
        %v1773 = vpop.f32.mrf.mxu0
        %v1774 = vadd.f32 %v1725, %v1773
        %v1775 = vpop.f32.mrf.mxu0
        %v1776 = vadd.f32 %v1727, %v1775
        %1777 = vdwg.mxu0
        %1778 = vst [vmem:[%s374] sm:$0xff] %v1739
        %1779 = vst [vmem:[%s374 + $0x8] sm:$0xff] %v1741
        %1780 = vst [vmem:[%s374 + $0x10] sm:$0xff] %v1744
        %1781 = vst [vmem:[%s374 + $0x18] sm:$0xff] %v1746
        %1782 = vst [vmem:[%s374 + $0x20] sm:$0xff] %v1749
        %1783 = vst [vmem:[%s374 + $0x28] sm:$0xff] %v1751
        %1784 = vst [vmem:[%s374 + $0x30] sm:$0xff] %v1754
        %1785 = vst [vmem:[%s374 + $0x38] sm:$0xff] %v1756
        %1786 = vst [vmem:[%s374 + $0x40] sm:$0xff] %v1759
        %1787 = vst [vmem:[%s374 + $0x48] sm:$0xff] %v1761
        %1788 = vst [vmem:[%s374 + $0x50] sm:$0xff] %v1764
        %1789 = vst [vmem:[%s374 + $0x58] sm:$0xff] %v1766
        %1790 = vst [vmem:[%s374 + $0x60] sm:$0xff] %v1769
        %1791 = vst [vmem:[%s374 + $0x68] sm:$0xff] %v1771
        %1792 = vst [vmem:[%s374 + $0x70] sm:$0xff] %v1774
        %1793 = vst [vmem:[%s374 + $0x78] sm:$0xff] %v1776
        %s1794 = sand.u32 %s227, 1
        %s1795 = scalar_lea.sflag [#allocation4], %s1794
        %s1796 = sand.u32 %s227, 1
        %s1797 = smul.addr %s1796, 128
        %s1798 = scalar_lea.vmem [#allocation8], %s1797
        // Predicated region
        $region69: #{tpu_custom_call.1} parent=55 // pred_check
          %p1799 = pneg %p237
        $region70: #{tpu_custom_call.1} parent=55 // pred_check_branch
          %1801 = sbr.rel (%p1799) target = $region72
        $region71: #{tpu_custom_call.1} parent=55 // pred_region
          %s1802 = smul.u32 16, %s25
          %1804 = vsyncadd %s1795, 0
          %s1805 = smul.addr %s1802, 8
          %s1806 = scalar_lea.hbm %s9, %s1805
          %s1807 = sshll.u32 %s1798, 4
          %s1808 = int_to_ptr.vmem [resolvable:$true] %s1807
          %s1809 = sshll.u32 %s1806, 4
          %s1810 = int_to_ptr.hbm [resolvable:$true] %s1809
          %1815 = dma.vmem_to_hbm [thread:$0]  %s1808, 2048, %s1810, %s1795, 128, 128, 8
        $region72: #{tpu_custom_call.1} parent=55 // pred_fallthru
          _
      $region56: #{tpu_custom_call.1} parent=5 // pred_fallthru
        _
      %p1816 = scmp.le.s32.totalorder 2, %s20
      // Predicated region
      $region73: #{tpu_custom_call.1} parent=5 // pred_check
        %p1817 = pneg %p1816
      $region74: #{tpu_custom_call.1} parent=5 // pred_check_branch
        %1819 = sbr.rel (%p1817) target = $region76
      $region75: #{tpu_custom_call.1} parent=5 // pred_region
        %s1820 = ssub.s32 %s20, 2
        // Predicated region
        $region77: #{tpu_custom_call.1} parent=75 // pred_check
          %p1821 = pneg %p243
        $region78: #{tpu_custom_call.1} parent=75 // pred_check_branch
          %1823 = sbr.rel (%p1821) target = $region80
        $region79: #{tpu_custom_call.1} parent=75 // pred_region
          %s1824 = sand.u32 %s228, 1
          %s1825 = scalar_lea.sflag [#allocation4], %s1824
          %s1826 = sand.u32 %s228, 1
          %s1827 = smul.addr %s1826, 128
          %s1828 = scalar_lea.vmem [#allocation8], %s1827
          %1830 = dma.done %s1825, 2048
        $region80: #{tpu_custom_call.1} parent=75 // pred_fallthru
          _
      $region76: #{tpu_custom_call.1} parent=5 // pred_fallthru
        _
    $region6: #{tpu_custom_call.1} parent=1 // loop_footer
      %s24 = sadd.s32 1, %s20
    $region7: #{tpu_custom_call.1} parent=1 // loop_footer_branch
      %19 = sbr.rel target = $region3
    $region8: #{tpu_custom_call.1} parent=1 // loop_exit
      _
    %1831 = vsyncpa [#allocation3], 1
    %s1832 = scalar_lea.sflag [#allocation3], 1
    %1833 = vsyncpa %s1832, 1
    %1834 = vsyncpa [#allocation6], 1
    %1835 = vsyncpa [#allocation4], 1
    %s1836 = scalar_lea.sflag [#allocation4], 1
    %1837 = vsyncpa %s1836, 1

</llo_original>
